<compile_context>
chip_gen: v7x
topology: tpu7x:2x2x1
jax: 0.10.0
libtpu: 0.0.40
codegen_flags: <defaults>
</compile_context>

<pallas_src>
import functools

import numpy as np
import jax
import jax.numpy as jnp
from jax.experimental import pallas as pl
from jax.experimental.pallas import tpu as pltpu

LN_EPS = 1e-5  # nn.LayerNorm default


# ---------------------------------------------------------------------------
# helpers (used both inside the kernel and in the pure-JAX reference)
# ---------------------------------------------------------------------------
def _ln(x, g, b, eps=LN_EPS):
    mu = jnp.mean(x, axis=-1, keepdims=True)
    var = jnp.mean((x - mu) ** 2, axis=-1, keepdims=True)
    return (x - mu) * jax.lax.rsqrt(var + eps) * g + b


# ---------------------------------------------------------------------------
# fused CrossAttention kernel  (one grid step == one batch element)
# ---------------------------------------------------------------------------
def _cross_attn_kernel(x_ref, vec_ref, wq_ref, wkv_ref, wo_ref,
                       o_ref, attn_ref, *, heads, dh, scale):
    """x_ref block: (1, L, D).  vec_ref: (5, D) packed vectors
    [norm_g, norm_b, out_bias, out_ln_g, out_ln_b].
    Weights arrive pre-permuted (head-contiguous) and pre-transposed:
      wq_ref:  (D, inner)        -- emits permuted q
      wkv_ref: (inner, 2*inner)  -- [Wk^T | Wv^T], consumes permuted q,
                                    emits permuted k (cols [0,inner)) and
                                    permuted v (cols [inner, 2*inner))
      wo_ref:  (inner, D)        -- consumes '(h d)' layout
    attn_ref: VMEM scratch (L, inner) that collects per-head outputs."""
    inner = heads * dh
    x = x_ref[0]                                                     # (L, D)

    # CrossAttention.norm
    xn = _ln(x, vec_ref[0:1], vec_ref[1:2])

    # q = q_proj(xn);  [k | v] = q @ [Wk^T | Wv^T]   (context is None)
    q = jnp.dot(xn, wq_ref[...], preferred_element_type=jnp.float32)   # (L, inner)
    kv = jnp.dot(q, wkv_ref[...], preferred_element_type=jnp.float32)  # (L, 2*inner)
    qs = q * scale                                                      # scale once

    # per-head attention; heads are contiguous dh-wide column blocks.
    for h in range(heads):
        lo = h * dh
        qh = qs[:, lo:lo + dh]                                       # (L, dh)
        kh = kv[:, lo:lo + dh]
        vh = kv[:, inner + lo:inner + lo + dh]
        # sim[i, j] = sum_d qh[i, d] * kh[j, d]  -- no explicit transpose.
        sim = jax.lax.dot_general(qh, kh, (((1,), (1,)), ((), ())),
                                  preferred_element_type=jnp.float32)  # (L, L)
        sim = sim - jnp.max(sim, axis=-1, keepdims=True)
        p = jnp.exp(sim)
        p = p * pl.reciprocal(jnp.sum(p, axis=-1, keepdims=True), approx=True)
        # 'b h i d -> b i (h d)': head h lands at columns [h*dh, (h+1)*dh)
        attn_ref[:, lo:lo + dh] = jnp.dot(p, vh,
                                          preferred_element_type=jnp.float32)

    # out_proj: Linear(inner, D) + Dropout(identity) + LayerNorm(D)
    out = jnp.dot(attn_ref[...], wo_ref[...],
                  preferred_element_type=jnp.float32) + vec_ref[2:3]
    out = _ln(out, vec_ref[3:4], vec_ref[4:5])
    o_ref[0] = out


# ---------------------------------------------------------------------------
# host-side wrapper
# ---------------------------------------------------------------------------
def prepare_params(params, heads, dh):
    """One-time layout glue: head permutation + transposition + vector packing."""
    # einops 'b i (d h) -> b h i d' head split == column index d*heads + h.
    # perm reorders outputs so each head is a contiguous dh-wide column block.
    perm = np.array([d * heads + h for h in range(heads) for d in range(dh)])
    wq_t = params["wq"][perm, :].T                     # (D, inner)
    wk_t = params["wk"][perm][:, perm].T               # (inner, inner)
    wv_t = params["wv"][perm][:, perm].T
    wkv_t = jnp.concatenate([wk_t, wv_t], axis=1)      # (inner, 2*inner) fused K|V
    wo_t = params["wo"].T                              # (inner, D)
    vecs = jnp.stack([params["norm_g"], params["norm_b"], params["out_b"],
                      params["out_ln_g"], params["out_ln_b"]], axis=0)  # (5, D)
    return dict(vecs=vecs, wq_t=wq_t, wkv_t=wkv_t, wo_t=wo_t)


@functools.partial(jax.jit, static_argnames=("heads", "dh"))
def cross_attention_pallas(x, vecs, wq_t, wkv_t, wo_t, *, heads, dh):
    B, L, D = x.shape
    inner = heads * dh
    scale = dh ** (-0.5)
    kernel = functools.partial(_cross_attn_kernel, heads=heads, dh=dh, scale=scale)
    return pl.pallas_call(
        kernel,
        grid=(B,),
        in_specs=[
            pl.BlockSpec((1, L, D), lambda b: (b, 0, 0)),      # x, per-batch tile
            pl.BlockSpec(vecs.shape, lambda b: (0, 0)),        # packed vectors
            pl.BlockSpec(wq_t.shape, lambda b: (0, 0)),
            pl.BlockSpec(wkv_t.shape, lambda b: (0, 0)),
            pl.BlockSpec(wo_t.shape, lambda b: (0, 0)),
        ],
        out_specs=pl.BlockSpec((1, L, D), lambda b: (b, 0, 0)),
        out_shape=jax.ShapeDtypeStruct((B, L, D), jnp.float32),
        scratch_shapes=[pltpu.VMEM((L, inner), jnp.float32)],   # per-head outputs
        compiler_params=pltpu.CompilerParams(
            dimension_semantics=("parallel",)),                 # B across TCs on v7x
    )(x, vecs, wq_t, wkv_t, wo_t)


# ---------------------------------------------------------------------------
# deterministic synthetic parameters (no checkpoint)
# ---------------------------------------------------------------------------
def init_params(key, D, heads, dh):
    inner = heads * dh
    ks = jax.random.split(key, 9)

    def w(k, shape, fan_in):
        return jax.random.normal(k, shape, dtype=jnp.float32) / np.sqrt(fan_in)

    return {
        "norm_g": 1.0 + 0.1 * jax.random.normal(ks[0], (D,), jnp.float32),
        "norm_b": 0.05 * jax.random.normal(ks[1], (D,), jnp.float32),
        "wq": w(ks[2], (inner, D), D),          # nn.Linear(query_dim, inner), no bias
        "wk": w(ks[3], (inner, inner), inner),  # consumes q (context=None path)
        "wv": w(ks[4], (inner, inner), inner),
        "wo": w(ks[5], (D, inner), inner),      # nn.Linear(inner, query_dim)
        "out_b": 0.05 * jax.random.normal(ks[6], (D,), jnp.float32),
        "out_ln_g": 1.0 + 0.1 * jax.random.normal(ks[7], (D,), jnp.float32),
        "out_ln_b": 0.05 * jax.random.normal(ks[8], (D,), jnp.float32),
    }


# ---------------------------------------------------------------------------
# pure-JAX reference (mirrors the PyTorch forward, incl. the '(d h)' split)
# ---------------------------------------------------------------------------
def reference_forward(x, params, heads, dh):
    B, L, D = x.shape
    inner = heads * dh
    scale = dh ** (-0.5)
    hp = jax.lax.Precision.HIGHEST

    xn = _ln(x, params["norm_g"], params["norm_b"])
    q = jnp.einsum("bld,ed->ble", xn, params["wq"], precision=hp)
    k = jnp.einsum("ble,fe->blf", q, params["wk"], precision=hp)
    v = jnp.einsum("ble,fe->blf", q, params["wv"], precision=hp)
    qh = q.reshape(B, L, dh, heads).transpose(0, 3, 1, 2)   # 'b i (d h) -> b h i d'
    kh = k.reshape(B, L, dh, heads).transpose(0, 3, 1, 2)
    vh = v.reshape(B, L, dh, heads).transpose(0, 3, 1, 2)
    sim = jnp.einsum("bhid,bhjd->bhij", qh * scale, kh, precision=hp)
    att = jax.nn.softmax(sim, axis=-1)
    out = jnp.einsum("bhij,bhjd->bhid", att, vh, precision=hp)
    out = out.transpose(0, 2, 1, 3).reshape(B, L, inner)    # 'b h i d -> b i (h d)'
    out = jnp.einsum("ble,de->bld", out, params["wo"], precision=hp) + params["out_b"]
    return _ln(out, params["out_ln_g"], params["out_ln_b"])


if __name__ == "__main__":
    # CrossAttention(query_dim=32, context_dim=None, heads=4, dim_head=16)
    B, L, D = 2, 64, 32
    heads, dh = 4, 16

    key = jax.random.PRNGKey(0)
    kx, kp = jax.random.split(key)
    x = jax.random.normal(kx, (B, L, D), dtype=jnp.float32)
    params = init_params(kp, D, heads, dh)

    prepped = prepare_params(params, heads, dh)   # one-time layout glue (outside jit path)
    out = cross_attention_pallas(x, prepped["vecs"], prepped["wq_t"],
                                 prepped["wkv_t"], prepped["wo_t"],
                                 heads=heads, dh=dh)
    out = jax.block_until_ready(out)

    ref = reference_forward(x, params, heads, dh)
    assert out.shape == (B, L, D)
    assert bool(jnp.all(jnp.isfinite(out)))
    max_err = float(jnp.max(jnp.abs(out - ref)))
    assert bool(jnp.allclose(out, ref, rtol=2e-2, atol=2e-2)), max_err
    print("KERNEL_OK")
</pallas_src>

<mosaic_0001>
module attributes {stable_mosaic.version = 11 : i64} {
  func.func @_cross_attn_kernel(%arg0: i32, %arg1: memref<1x64x32xf32, #tpu.memory_space<vmem>>, %arg2: memref<5x32xf32, #tpu.memory_space<vmem>>, %arg3: memref<32x64xf32, #tpu.memory_space<vmem>>, %arg4: memref<64x128xf32, #tpu.memory_space<vmem>>, %arg5: memref<64x32xf32, #tpu.memory_space<vmem>>, %arg6: memref<1x64x32xf32, #tpu.memory_space<vmem>>, %arg7: memref<64x64xf32, #tpu.memory_space<vmem>>) attributes {dimension_semantics = [#tpu.dimension_semantics<parallel>], iteration_bounds = array<i64: 2>, scalar_prefetch = 0 : i64, scratch_operands = 1 : i64, tpu.core_type = #tpu.core_type<tc>, window_params = [{transform_indices = @transform_0, window_bounds = array<i64: 1, 64, 32>}, {pipeline_mode = #tpu.pipeline_mode<synchronous>, transform_indices = @transform_1, window_bounds = array<i64: 5, 32>}, {pipeline_mode = #tpu.pipeline_mode<synchronous>, transform_indices = @transform_2, window_bounds = array<i64: 32, 64>}, {pipeline_mode = #tpu.pipeline_mode<synchronous>, transform_indices = @transform_3, window_bounds = array<i64: 64, 128>}, {pipeline_mode = #tpu.pipeline_mode<synchronous>, transform_indices = @transform_4, window_bounds = array<i64: 64, 32>}, {transform_indices = @transform_5, window_bounds = array<i64: 1, 64, 32>}]} {
    %c0 = arith.constant 0 : index
    %c0_0 = arith.constant 0 : index
    %c0_1 = arith.constant 0 : index
    %0 = vector.load %arg1[%c0, %c0_0, %c0_1] : memref<1x64x32xf32, #tpu.memory_space<vmem>>, vector<1x64x32xf32>
    %1 = vector.shape_cast %0 : vector<1x64x32xf32> to vector<64x32xf32>
    %c0_2 = arith.constant 0 : index
    %c0_3 = arith.constant 0 : index
    %2 = vector.load %arg2[%c0_2, %c0_3] : memref<5x32xf32, #tpu.memory_space<vmem>>, vector<1x32xf32>
    %c1 = arith.constant 1 : index
    %c0_4 = arith.constant 0 : index
    %3 = vector.load %arg2[%c1, %c0_4] : memref<5x32xf32, #tpu.memory_space<vmem>>, vector<1x32xf32>
    %cst = arith.constant dense<0.000000e+00> : vector<64xf32>
    %4 = vector.multi_reduction <add>, %1, %cst [1] : vector<64x32xf32> to vector<64xf32>
    %5 = vector.shape_cast %4 : vector<64xf32> to vector<64x1xf32>
    %cst_5 = arith.constant 3.200000e+01 : f32
    %6 = vector.broadcast %cst_5 : f32 to vector<64x1xf32>
    %7 = arith.divf %5, %6 : vector<64x1xf32>
    %8 = vector.broadcast %7 : vector<64x1xf32> to vector<64x32xf32>
    %9 = arith.subf %1, %8 : vector<64x32xf32>
    %10 = arith.mulf %9, %9 : vector<64x32xf32>
    %cst_6 = arith.constant dense<0.000000e+00> : vector<64xf32>
    %11 = vector.multi_reduction <add>, %10, %cst_6 [1] : vector<64x32xf32> to vector<64xf32>
    %12 = vector.shape_cast %11 : vector<64xf32> to vector<64x1xf32>
    %cst_7 = arith.constant 3.200000e+01 : f32
    %13 = vector.broadcast %cst_7 : f32 to vector<64x1xf32>
    %14 = arith.divf %12, %13 : vector<64x1xf32>
    %15 = vector.broadcast %7 : vector<64x1xf32> to vector<64x32xf32>
    %16 = arith.subf %1, %15 : vector<64x32xf32>
    %cst_8 = arith.constant 9.99999974E-6 : f32
    %17 = vector.broadcast %cst_8 : f32 to vector<64x1xf32>
    %18 = arith.addf %14, %17 : vector<64x1xf32>
    %19 = math.rsqrt %18 : vector<64x1xf32>
    %20 = vector.broadcast %19 : vector<64x1xf32> to vector<64x32xf32>
    %21 = arith.mulf %16, %20 : vector<64x32xf32>
    %22 = vector.broadcast %2 : vector<1x32xf32> to vector<64x32xf32>
    %23 = arith.mulf %21, %22 : vector<64x32xf32>
    %24 = vector.broadcast %3 : vector<1x32xf32> to vector<64x32xf32>
    %25 = arith.addf %23, %24 : vector<64x32xf32>
    %c0_9 = arith.constant 0 : index
    %c0_10 = arith.constant 0 : index
    %26 = vector.load %arg3[%c0_9, %c0_10] : memref<32x64xf32, #tpu.memory_space<vmem>>, vector<32x64xf32>
    %cst_11 = arith.constant dense<0.000000e+00> : vector<64x64xf32>
    %27 = tpu.matmul %25, %26, %cst_11 {dimension_numbers = #tpu.dot_dimension_numbers<[1], [0], [0], [1], [0, 0, 1, 1], [], []>} : vector<64x32xf32>, vector<32x64xf32>, vector<64x64xf32> -> vector<64x64xf32>
    %c0_12 = arith.constant 0 : index
    %c0_13 = arith.constant 0 : index
    %28 = vector.load %arg4[%c0_12, %c0_13] : memref<64x128xf32, #tpu.memory_space<vmem>>, vector<64x128xf32>
    %cst_14 = arith.constant dense<0.000000e+00> : vector<64x128xf32>
    %29 = tpu.matmul %27, %28, %cst_14 {dimension_numbers = #tpu.dot_dimension_numbers<[1], [0], [0], [1], [0, 0, 1, 1], [], []>} : vector<64x64xf32>, vector<64x128xf32>, vector<64x128xf32> -> vector<64x128xf32>
    %cst_15 = arith.constant 2.500000e-01 : f32
    %30 = vector.broadcast %cst_15 : f32 to vector<64x64xf32>
    %31 = arith.mulf %27, %30 : vector<64x64xf32>
    %32 = vector.extract_strided_slice %31 {offsets = [0, 0], sizes = [64, 16], strides = [1, 1]} : vector<64x64xf32> to vector<64x16xf32>
    %33 = vector.extract_strided_slice %29 {offsets = [0, 0], sizes = [64, 16], strides = [1, 1]} : vector<64x128xf32> to vector<64x16xf32>
    %34 = vector.extract_strided_slice %29 {offsets = [0, 64], sizes = [64, 16], strides = [1, 1]} : vector<64x128xf32> to vector<64x16xf32>
    %cst_16 = arith.constant dense<0.000000e+00> : vector<64x64xf32>
    %35 = tpu.matmul %32, %33, %cst_16 {dimension_numbers = #tpu.dot_dimension_numbers<[1], [1], [0], [0], [0, 0, 1, 0], [], []>} : vector<64x16xf32>, vector<64x16xf32>, vector<64x64xf32> -> vector<64x64xf32>
    %cst_17 = arith.constant dense<0xFF800000> : vector<64xf32>
    %36 = vector.multi_reduction <maximumf>, %35, %cst_17 [1] : vector<64x64xf32> to vector<64xf32>
    %37 = vector.shape_cast %36 : vector<64xf32> to vector<64x1xf32>
    %38 = vector.broadcast %37 : vector<64x1xf32> to vector<64x64xf32>
    %39 = arith.subf %35, %38 : vector<64x64xf32>
    %40 = math.exp %39 : vector<64x64xf32>
    %cst_18 = arith.constant dense<0.000000e+00> : vector<64xf32>
    %41 = vector.multi_reduction <add>, %40, %cst_18 [1] : vector<64x64xf32> to vector<64xf32>
    %42 = vector.shape_cast %41 : vector<64xf32> to vector<64x1xf32>
    %43 = tpu.reciprocal %42 {approx = true} : vector<64x1xf32> -> vector<64x1xf32>
    %44 = vector.broadcast %43 : vector<64x1xf32> to vector<64x64xf32>
    %45 = arith.mulf %40, %44 : vector<64x64xf32>
    %cst_19 = arith.constant dense<0.000000e+00> : vector<64x16xf32>
    %46 = tpu.matmul %45, %34, %cst_19 {dimension_numbers = #tpu.dot_dimension_numbers<[1], [0], [0], [1], [0, 0, 1, 1], [], []>} : vector<64x64xf32>, vector<64x16xf32>, vector<64x16xf32> -> vector<64x16xf32>
    %c0_20 = arith.constant 0 : index
    %c0_21 = arith.constant 0 : index
    %47 = vector.load %arg7[%c0_20, %c0_21] : memref<64x64xf32, #tpu.memory_space<vmem>>, vector<64x16xf32>
    tpu.vector_store %arg7[%c0_20, %c0_21], %46 {strides = array<i32>} : memref<64x64xf32, #tpu.memory_space<vmem>>, vector<64x16xf32>,
    %48 = vector.extract_strided_slice %31 {offsets = [0, 16], sizes = [64, 16], strides = [1, 1]} : vector<64x64xf32> to vector<64x16xf32>
    %49 = vector.extract_strided_slice %29 {offsets = [0, 16], sizes = [64, 16], strides = [1, 1]} : vector<64x128xf32> to vector<64x16xf32>
    %50 = vector.extract_strided_slice %29 {offsets = [0, 80], sizes = [64, 16], strides = [1, 1]} : vector<64x128xf32> to vector<64x16xf32>
    %cst_22 = arith.constant dense<0.000000e+00> : vector<64x64xf32>
    %51 = tpu.matmul %48, %49, %cst_22 {dimension_numbers = #tpu.dot_dimension_numbers<[1], [1], [0], [0], [0, 0, 1, 0], [], []>} : vector<64x16xf32>, vector<64x16xf32>, vector<64x64xf32> -> vector<64x64xf32>
    %cst_23 = arith.constant dense<0xFF800000> : vector<64xf32>
    %52 = vector.multi_reduction <maximumf>, %51, %cst_23 [1] : vector<64x64xf32> to vector<64xf32>
    %53 = vector.shape_cast %52 : vector<64xf32> to vector<64x1xf32>
    %54 = vector.broadcast %53 : vector<64x1xf32> to vector<64x64xf32>
    %55 = arith.subf %51, %54 : vector<64x64xf32>
    %56 = math.exp %55 : vector<64x64xf32>
    %cst_24 = arith.constant dense<0.000000e+00> : vector<64xf32>
    %57 = vector.multi_reduction <add>, %56, %cst_24 [1] : vector<64x64xf32> to vector<64xf32>
    %58 = vector.shape_cast %57 : vector<64xf32> to vector<64x1xf32>
    %59 = tpu.reciprocal %58 {approx = true} : vector<64x1xf32> -> vector<64x1xf32>
    %60 = vector.broadcast %59 : vector<64x1xf32> to vector<64x64xf32>
    %61 = arith.mulf %56, %60 : vector<64x64xf32>
    %cst_25 = arith.constant dense<0.000000e+00> : vector<64x16xf32>
    %62 = tpu.matmul %61, %50, %cst_25 {dimension_numbers = #tpu.dot_dimension_numbers<[1], [0], [0], [1], [0, 0, 1, 1], [], []>} : vector<64x64xf32>, vector<64x16xf32>, vector<64x16xf32> -> vector<64x16xf32>
    %c0_26 = arith.constant 0 : index
    %c16 = arith.constant 16 : index
    %63 = vector.load %arg7[%c0_26, %c16] : memref<64x64xf32, #tpu.memory_space<vmem>>, vector<64x16xf32>
    tpu.vector_store %arg7[%c0_26, %c16], %62 {strides = array<i32>} : memref<64x64xf32, #tpu.memory_space<vmem>>, vector<64x16xf32>,
    %64 = vector.extract_strided_slice %31 {offsets = [0, 32], sizes = [64, 16], strides = [1, 1]} : vector<64x64xf32> to vector<64x16xf32>
    %65 = vector.extract_strided_slice %29 {offsets = [0, 32], sizes = [64, 16], strides = [1, 1]} : vector<64x128xf32> to vector<64x16xf32>
    %66 = vector.extract_strided_slice %29 {offsets = [0, 96], sizes = [64, 16], strides = [1, 1]} : vector<64x128xf32> to vector<64x16xf32>
    %cst_27 = arith.constant dense<0.000000e+00> : vector<64x64xf32>
    %67 = tpu.matmul %64, %65, %cst_27 {dimension_numbers = #tpu.dot_dimension_numbers<[1], [1], [0], [0], [0, 0, 1, 0], [], []>} : vector<64x16xf32>, vector<64x16xf32>, vector<64x64xf32> -> vector<64x64xf32>
    %cst_28 = arith.constant dense<0xFF800000> : vector<64xf32>
    %68 = vector.multi_reduction <maximumf>, %67, %cst_28 [1] : vector<64x64xf32> to vector<64xf32>
    %69 = vector.shape_cast %68 : vector<64xf32> to vector<64x1xf32>
    %70 = vector.broadcast %69 : vector<64x1xf32> to vector<64x64xf32>
    %71 = arith.subf %67, %70 : vector<64x64xf32>
    %72 = math.exp %71 : vector<64x64xf32>
    %cst_29 = arith.constant dense<0.000000e+00> : vector<64xf32>
    %73 = vector.multi_reduction <add>, %72, %cst_29 [1] : vector<64x64xf32> to vector<64xf32>
    %74 = vector.shape_cast %73 : vector<64xf32> to vector<64x1xf32>
    %75 = tpu.reciprocal %74 {approx = true} : vector<64x1xf32> -> vector<64x1xf32>
    %76 = vector.broadcast %75 : vector<64x1xf32> to vector<64x64xf32>
    %77 = arith.mulf %72, %76 : vector<64x64xf32>
    %cst_30 = arith.constant dense<0.000000e+00> : vector<64x16xf32>
    %78 = tpu.matmul %77, %66, %cst_30 {dimension_numbers = #tpu.dot_dimension_numbers<[1], [0], [0], [1], [0, 0, 1, 1], [], []>} : vector<64x64xf32>, vector<64x16xf32>, vector<64x16xf32> -> vector<64x16xf32>
    %c0_31 = arith.constant 0 : index
    %c32 = arith.constant 32 : index
    %79 = vector.load %arg7[%c0_31, %c32] : memref<64x64xf32, #tpu.memory_space<vmem>>, vector<64x16xf32>
    tpu.vector_store %arg7[%c0_31, %c32], %78 {strides = array<i32>} : memref<64x64xf32, #tpu.memory_space<vmem>>, vector<64x16xf32>,
    %80 = vector.extract_strided_slice %31 {offsets = [0, 48], sizes = [64, 16], strides = [1, 1]} : vector<64x64xf32> to vector<64x16xf32>
    %81 = vector.extract_strided_slice %29 {offsets = [0, 48], sizes = [64, 16], strides = [1, 1]} : vector<64x128xf32> to vector<64x16xf32>
    %82 = vector.extract_strided_slice %29 {offsets = [0, 112], sizes = [64, 16], strides = [1, 1]} : vector<64x128xf32> to vector<64x16xf32>
    %cst_32 = arith.constant dense<0.000000e+00> : vector<64x64xf32>
    %83 = tpu.matmul %80, %81, %cst_32 {dimension_numbers = #tpu.dot_dimension_numbers<[1], [1], [0], [0], [0, 0, 1, 0], [], []>} : vector<64x16xf32>, vector<64x16xf32>, vector<64x64xf32> -> vector<64x64xf32>
    %cst_33 = arith.constant dense<0xFF800000> : vector<64xf32>
    %84 = vector.multi_reduction <maximumf>, %83, %cst_33 [1] : vector<64x64xf32> to vector<64xf32>
    %85 = vector.shape_cast %84 : vector<64xf32> to vector<64x1xf32>
    %86 = vector.broadcast %85 : vector<64x1xf32> to vector<64x64xf32>
    %87 = arith.subf %83, %86 : vector<64x64xf32>
    %88 = math.exp %87 : vector<64x64xf32>
    %cst_34 = arith.constant dense<0.000000e+00> : vector<64xf32>
    %89 = vector.multi_reduction <add>, %88, %cst_34 [1] : vector<64x64xf32> to vector<64xf32>
    %90 = vector.shape_cast %89 : vector<64xf32> to vector<64x1xf32>
    %91 = tpu.reciprocal %90 {approx = true} : vector<64x1xf32> -> vector<64x1xf32>
    %92 = vector.broadcast %91 : vector<64x1xf32> to vector<64x64xf32>
    %93 = arith.mulf %88, %92 : vector<64x64xf32>
    %cst_35 = arith.constant dense<0.000000e+00> : vector<64x16xf32>
    %94 = tpu.matmul %93, %82, %cst_35 {dimension_numbers = #tpu.dot_dimension_numbers<[1], [0], [0], [1], [0, 0, 1, 1], [], []>} : vector<64x64xf32>, vector<64x16xf32>, vector<64x16xf32> -> vector<64x16xf32>
    %c0_36 = arith.constant 0 : index
    %c48 = arith.constant 48 : index
    %95 = vector.load %arg7[%c0_36, %c48] : memref<64x64xf32, #tpu.memory_space<vmem>>, vector<64x16xf32>
    tpu.vector_store %arg7[%c0_36, %c48], %94 {strides = array<i32>} : memref<64x64xf32, #tpu.memory_space<vmem>>, vector<64x16xf32>,
    %c0_37 = arith.constant 0 : index
    %c0_38 = arith.constant 0 : index
    %96 = vector.load %arg7[%c0_37, %c0_38] : memref<64x64xf32, #tpu.memory_space<vmem>>, vector<64x64xf32>
    %c0_39 = arith.constant 0 : index
    %c0_40 = arith.constant 0 : index
    %97 = vector.load %arg5[%c0_39, %c0_40] : memref<64x32xf32, #tpu.memory_space<vmem>>, vector<64x32xf32>
    %cst_41 = arith.constant dense<0.000000e+00> : vector<64x32xf32>
    %98 = tpu.matmul %96, %97, %cst_41 {dimension_numbers = #tpu.dot_dimension_numbers<[1], [0], [0], [1], [0, 0, 1, 1], [], []>} : vector<64x64xf32>, vector<64x32xf32>, vector<64x32xf32> -> vector<64x32xf32>
    %c2 = arith.constant 2 : index
    %c0_42 = arith.constant 0 : index
    %99 = vector.load %arg2[%c2, %c0_42] : memref<5x32xf32, #tpu.memory_space<vmem>>, vector<1x32xf32>
    %100 = vector.broadcast %99 : vector<1x32xf32> to vector<64x32xf32>
    %101 = arith.addf %98, %100 : vector<64x32xf32>
    %c3 = arith.constant 3 : index
    %c0_43 = arith.constant 0 : index
    %102 = vector.load %arg2[%c3, %c0_43] : memref<5x32xf32, #tpu.memory_space<vmem>>, vector<1x32xf32>
    %c4 = arith.constant 4 : index
    %c0_44 = arith.constant 0 : index
    %103 = vector.load %arg2[%c4, %c0_44] : memref<5x32xf32, #tpu.memory_space<vmem>>, vector<1x32xf32>
    %cst_45 = arith.constant dense<0.000000e+00> : vector<64xf32>
    %104 = vector.multi_reduction <add>, %101, %cst_45 [1] : vector<64x32xf32> to vector<64xf32>
    %105 = vector.shape_cast %104 : vector<64xf32> to vector<64x1xf32>
    %cst_46 = arith.constant 3.200000e+01 : f32
    %106 = vector.broadcast %cst_46 : f32 to vector<64x1xf32>
    %107 = arith.divf %105, %106 : vector<64x1xf32>
    %108 = vector.broadcast %107 : vector<64x1xf32> to vector<64x32xf32>
    %109 = arith.subf %101, %108 : vector<64x32xf32>
    %110 = arith.mulf %109, %109 : vector<64x32xf32>
    %cst_47 = arith.constant dense<0.000000e+00> : vector<64xf32>
    %111 = vector.multi_reduction <add>, %110, %cst_47 [1] : vector<64x32xf32> to vector<64xf32>
    %112 = vector.shape_cast %111 : vector<64xf32> to vector<64x1xf32>
    %cst_48 = arith.constant 3.200000e+01 : f32
    %113 = vector.broadcast %cst_48 : f32 to vector<64x1xf32>
    %114 = arith.divf %112, %113 : vector<64x1xf32>
    %115 = vector.broadcast %107 : vector<64x1xf32> to vector<64x32xf32>
    %116 = arith.subf %101, %115 : vector<64x32xf32>
    %cst_49 = arith.constant 9.99999974E-6 : f32
    %117 = vector.broadcast %cst_49 : f32 to vector<64x1xf32>
    %118 = arith.addf %114, %117 : vector<64x1xf32>
    %119 = math.rsqrt %118 : vector<64x1xf32>
    %120 = vector.broadcast %119 : vector<64x1xf32> to vector<64x32xf32>
    %121 = arith.mulf %116, %120 : vector<64x32xf32>
    %122 = vector.broadcast %102 : vector<1x32xf32> to vector<64x32xf32>
    %123 = arith.mulf %121, %122 : vector<64x32xf32>
    %124 = vector.broadcast %103 : vector<1x32xf32> to vector<64x32xf32>
    %125 = arith.addf %123, %124 : vector<64x32xf32>
    %c0_50 = arith.constant 0 : index
    %c0_51 = arith.constant 0 : index
    %c0_52 = arith.constant 0 : index
    %126 = vector.load %arg6[%c0_50, %c0_51, %c0_52] : memref<1x64x32xf32, #tpu.memory_space<vmem>>, vector<1x64x32xf32>
    %127 = vector.shape_cast %126 : vector<1x64x32xf32> to vector<64x32xf32>
    %128 = vector.shape_cast %125 : vector<64x32xf32> to vector<1x64x32xf32>
    tpu.vector_store %arg6[%c0_50, %c0_51, %c0_52], %128 {strides = array<i32>} : memref<1x64x32xf32, #tpu.memory_space<vmem>>, vector<1x64x32xf32>,
    return
  }
  func.func @transform_0(%arg0: i32) -> (i32, i32, i32) {
    %c0_i32 = arith.constant 0 : i32
    %c0_i32_0 = arith.constant 0 : i32
    %c0_i32_1 = arith.constant 0 : i32
    return %arg0, %c0_i32, %c0_i32_0 : i32, i32, i32
  }
  func.func @transform_1(%arg0: i32) -> (i32, i32) {
    %c0_i32 = arith.constant 0 : i32
    %c0_i32_0 = arith.constant 0 : i32
    %c0_i32_1 = arith.constant 0 : i32
    return %c0_i32, %c0_i32_0 : i32, i32
  }
  func.func @transform_2(%arg0: i32) -> (i32, i32) {
    %c0_i32 = arith.constant 0 : i32
    %c0_i32_0 = arith.constant 0 : i32
    %c0_i32_1 = arith.constant 0 : i32
    return %c0_i32, %c0_i32_0 : i32, i32
  }
  func.func @transform_3(%arg0: i32) -> (i32, i32) {
    %c0_i32 = arith.constant 0 : i32
    %c0_i32_0 = arith.constant 0 : i32
    %c0_i32_1 = arith.constant 0 : i32
    return %c0_i32, %c0_i32_0 : i32, i32
  }
  func.func @transform_4(%arg0: i32) -> (i32, i32) {
    %c0_i32 = arith.constant 0 : i32
    %c0_i32_0 = arith.constant 0 : i32
    %c0_i32_1 = arith.constant 0 : i32
    return %c0_i32, %c0_i32_0 : i32, i32
  }
  func.func @transform_5(%arg0: i32) -> (i32, i32, i32) {
    %c0_i32 = arith.constant 0 : i32
    %c0_i32_0 = arith.constant 0 : i32
    %c0_i32_1 = arith.constant 0 : i32
    return %arg0, %c0_i32, %c0_i32_0 : i32, i32, i32
  }
}

</mosaic_0001>

<llo_original>
// kernel: cross_attention_pallas.1
$region0: #{cross_attention_pallas.1}
  #allocation0 [shape = 'u32[]', space=smem, size = 0x4, offset = 0x4, fixed_abs, tag = 'smem constant byte address 0x4 - core index']
  #allocation1 [shape = 'u32[144,128]{1,0:T(1,128)}', space=vmem, size = 0x12000, scoped, tag = 'internal scratch']
  #allocation2 [shape = 'f32[64,64]{1,0:T(8,128)}', space=vmem, size = 0x8000, scoped, tag = 'scratch operand']
  %s0 = inlined_call_operand.vmem [shape: f32[2,64,32], index: 0, kind: input, shape index: {}]
  %s1 = inlined_call_operand.vmem [shape: f32[5,32], index: 1, kind: input, shape index: {}]
  %s2 = inlined_call_operand.vmem [shape: f32[32,64], index: 2, kind: input, shape index: {}]
  %s3 = inlined_call_operand.vmem [shape: f32[64,128], index: 3, kind: input, shape index: {}]
  %s4 = inlined_call_operand.vmem [shape: f32[64,32], index: 4, kind: input, shape index: {}]
  %s5 = inlined_call_operand.vmem [shape: f32[2,64,32], index: 5, kind: output, shape index: {}]
  %s6 = sld [smem:[#allocation0]]
  $region53: #{cross_attention_pallas.1} parent=0
    _
  %s8 = ssub.s32 1, %s6
  %s9 = scalar_select 0, %s8, %s6
  loop: start=0, step=1, limit=4
  $region2: #{cross_attention_pallas.1} parent=0 // loop_pre_header
    _
  $region3: #{cross_attention_pallas.1} parent=0 // loop_header
    %s11 = sphi 0, %s15
    %p12 = scmp.ge.s32.totalorder %s11, 4
    %s21 = sphi 0, %s23
    %s24 = sphi 0, %s21
    %s25 = sphi 0, %s24
    %s41 = sphi 0, %s25
    %s45 = sphi 0, %s45
    %s47 = sphi 0, %s45
    %s48 = sphi 0, %s47
    %s62 = sphi 0, %s48
    %s66 = sphi 0, %s66
    %s68 = sphi 0, %s66
    %s69 = sphi 0, %s68
    %s83 = sphi 0, %s69
    %s87 = sphi 0, %s87
    %s89 = sphi 0, %s87
    %s90 = sphi 0, %s89
    %s104 = sphi 0, %s90
    %s108 = sphi 0, %s108
    %s110 = sphi 0, %s108
    %s111 = sphi 0, %s110
    %s125 = sphi 0, %s111
    %s131 = sphi 0, %s133
    %s134 = sphi 0, %s131
    %s135 = sphi 0, %s134
    %s151 = sphi 0, %s135
  $region4: #{cross_attention_pallas.1} parent=0 // loop_header_branch
    %14 = sbr.rel (%p12) target = $region8
  $region5: #{cross_attention_pallas.1} parent=0 // loop_body
    %s16 = ssub.s32 %s11, 1
    %s17 = ssub.s32 %s11, 2
    %s18 = sadd.s32 %s11, 1
    %s19 = ssub.s32 %s11, %s18
    %p20 = scmp.eq.s32.totalorder %s19, 0
    %s22 = sadd.s32 %s21, 1
    %s23 = scalar_select %p20, %s21, %s22
    %p26 = pneg %p20
    %p27 = scmp.eq.s32.totalorder %s11, 1
    %p28 = por %p26, %p27
    %p29 = scmp.ne.s32.totalorder %s21, %s24
    %p30 = scmp.eq.s32.totalorder %s11, 0
    %p31 = por %p29, %p30
    %p32 = scmp.ne.s32.totalorder %s21, %s24
    %p33 = scmp.eq.s32.totalorder %s16, 1
    %p34 = por %p32, %p33
    %p35 = scmp.ne.s32.totalorder %s24, %s25
    %p36 = scmp.eq.s32.totalorder %s16, 0
    %p37 = por %p35, %p36
    %p38 = scmp.ne.s32.totalorder %s24, %s25
    %p39 = scmp.eq.s32.totalorder %s17, 1
    %p40 = por %p38, %p39
    %p42 = scmp.ne.s32.totalorder %s25, %s41
    %p43 = scmp.eq.s32.totalorder %s17, 0
    %p44 = por %p42, %p43
    %s46 = sadd.s32 %s45, 1
    %p49 = scmp.eq.s32.totalorder %s11, 1
    %p50 = scmp.ne.s32.totalorder %s45, %s47
    %p51 = scmp.eq.s32.totalorder %s11, 0
    %p52 = por %p50, %p51
    %p53 = scmp.ne.s32.totalorder %s45, %s47
    %p54 = scmp.eq.s32.totalorder %s16, 1
    %p55 = por %p53, %p54
    %p56 = scmp.ne.s32.totalorder %s47, %s48
    %p57 = scmp.eq.s32.totalorder %s16, 0
    %p58 = por %p56, %p57
    %p59 = scmp.ne.s32.totalorder %s47, %s48
    %p60 = scmp.eq.s32.totalorder %s17, 1
    %p61 = por %p59, %p60
    %p63 = scmp.ne.s32.totalorder %s48, %s62
    %p64 = scmp.eq.s32.totalorder %s17, 0
    %p65 = por %p63, %p64
    %s67 = sadd.s32 %s66, 1
    %p70 = scmp.eq.s32.totalorder %s11, 1
    %p71 = scmp.ne.s32.totalorder %s66, %s68
    %p72 = scmp.eq.s32.totalorder %s11, 0
    %p73 = por %p71, %p72
    %p74 = scmp.ne.s32.totalorder %s66, %s68
    %p75 = scmp.eq.s32.totalorder %s16, 1
    %p76 = por %p74, %p75
    %p77 = scmp.ne.s32.totalorder %s68, %s69
    %p78 = scmp.eq.s32.totalorder %s16, 0
    %p79 = por %p77, %p78
    %p80 = scmp.ne.s32.totalorder %s68, %s69
    %p81 = scmp.eq.s32.totalorder %s17, 1
    %p82 = por %p80, %p81
    %p84 = scmp.ne.s32.totalorder %s69, %s83
    %p85 = scmp.eq.s32.totalorder %s17, 0
    %p86 = por %p84, %p85
    %s88 = sadd.s32 %s87, 1
    %p91 = scmp.eq.s32.totalorder %s11, 1
    %p92 = scmp.ne.s32.totalorder %s87, %s89
    %p93 = scmp.eq.s32.totalorder %s11, 0
    %p94 = por %p92, %p93
    %p95 = scmp.ne.s32.totalorder %s87, %s89
    %p96 = scmp.eq.s32.totalorder %s16, 1
    %p97 = por %p95, %p96
    %p98 = scmp.ne.s32.totalorder %s89, %s90
    %p99 = scmp.eq.s32.totalorder %s16, 0
    %p100 = por %p98, %p99
    %p101 = scmp.ne.s32.totalorder %s89, %s90
    %p102 = scmp.eq.s32.totalorder %s17, 1
    %p103 = por %p101, %p102
    %p105 = scmp.ne.s32.totalorder %s90, %s104
    %p106 = scmp.eq.s32.totalorder %s17, 0
    %p107 = por %p105, %p106
    %s109 = sadd.s32 %s108, 1
    %p112 = scmp.eq.s32.totalorder %s11, 1
    %p113 = scmp.ne.s32.totalorder %s108, %s110
    %p114 = scmp.eq.s32.totalorder %s11, 0
    %p115 = por %p113, %p114
    %p116 = scmp.ne.s32.totalorder %s108, %s110
    %p117 = scmp.eq.s32.totalorder %s16, 1
    %p118 = por %p116, %p117
    %p119 = scmp.ne.s32.totalorder %s110, %s111
    %p120 = scmp.eq.s32.totalorder %s16, 0
    %p121 = por %p119, %p120
    %p122 = scmp.ne.s32.totalorder %s110, %s111
    %p123 = scmp.eq.s32.totalorder %s17, 1
    %p124 = por %p122, %p123
    %p126 = scmp.ne.s32.totalorder %s111, %s125
    %p127 = scmp.eq.s32.totalorder %s17, 0
    %p128 = por %p126, %p127
    %s129 = ssub.s32 %s11, %s18
    %p130 = scmp.eq.s32.totalorder %s129, 0
    %s132 = sadd.s32 %s131, 1
    %s133 = scalar_select %p130, %s131, %s132
    %p136 = pneg %p130
    %p137 = scmp.eq.s32.totalorder %s11, 1
    %p138 = por %p136, %p137
    %p139 = scmp.ne.s32.totalorder %s131, %s134
    %p140 = scmp.eq.s32.totalorder %s11, 0
    %p141 = por %p139, %p140
    %p142 = scmp.ne.s32.totalorder %s131, %s134
    %p143 = scmp.eq.s32.totalorder %s16, 1
    %p144 = por %p142, %p143
    %p145 = scmp.ne.s32.totalorder %s134, %s135
    %p146 = scmp.eq.s32.totalorder %s16, 0
    %p147 = por %p145, %p146
    %p148 = scmp.ne.s32.totalorder %s134, %s135
    %p149 = scmp.eq.s32.totalorder %s17, 1
    %p150 = por %p148, %p149
    %p152 = scmp.ne.s32.totalorder %s135, %s151
    %p153 = scmp.eq.s32.totalorder %s17, 0
    %p154 = por %p152, %p153
    %p155 = scmp.le.s32.totalorder 1, %s11
    %p156 = scmp.lt.s32.totalorder %s11, 3
    %p157 = pnand %p155, %p156
    %p158 = pneg %p157
    // Predicated region
    $region9: #{cross_attention_pallas.1} parent=5 // pred_check
      _
    $region10: #{cross_attention_pallas.1} parent=5 // pred_check_branch
      %160 = sbr.rel (%p157) target = $region12
    $region11: #{cross_attention_pallas.1} parent=5 // pred_region
      %s161 = ssub.s32 %s11, 1
      // Predicated region
      $region13: #{cross_attention_pallas.1} parent=11 // pred_check
        %p162 = pneg %p58
      $region14: #{cross_attention_pallas.1} parent=11 // pred_check_branch
        %164 = sbr.rel (%p162) target = $region16
      $region15: #{cross_attention_pallas.1} parent=11 // pred_region
        _
      $region16: #{cross_attention_pallas.1} parent=11 // pred_fallthru
        _
      // Predicated region
      $region17: #{cross_attention_pallas.1} parent=11 // pred_check
        %p165 = pneg %p79
      $region18: #{cross_attention_pallas.1} parent=11 // pred_check_branch
        %167 = sbr.rel (%p165) target = $region20
      $region19: #{cross_attention_pallas.1} parent=11 // pred_region
        _
      $region20: #{cross_attention_pallas.1} parent=11 // pred_fallthru
        _
      // Predicated region
      $region21: #{cross_attention_pallas.1} parent=11 // pred_check
        %p168 = pneg %p100
      $region22: #{cross_attention_pallas.1} parent=11 // pred_check_branch
        %170 = sbr.rel (%p168) target = $region24
      $region23: #{cross_attention_pallas.1} parent=11 // pred_region
        _
      $region24: #{cross_attention_pallas.1} parent=11 // pred_fallthru
        _
      // Predicated region
      $region25: #{cross_attention_pallas.1} parent=11 // pred_check
        %p171 = pneg %p121
      $region26: #{cross_attention_pallas.1} parent=11 // pred_check_branch
        %173 = sbr.rel (%p171) target = $region28
      $region27: #{cross_attention_pallas.1} parent=11 // pred_region
        _
      $region28: #{cross_attention_pallas.1} parent=11 // pred_fallthru
        _
    $region12: #{cross_attention_pallas.1} parent=5 // pred_fallthru
      _
    %p174 = scmp.lt.s32.totalorder %s11, 2
    // Predicated region
    $region29: #{cross_attention_pallas.1} parent=5 // pred_check
      %p175 = pneg %p174
    $region30: #{cross_attention_pallas.1} parent=5 // pred_check_branch
      %177 = sbr.rel (%p175) target = $region32
    $region31: #{cross_attention_pallas.1} parent=5 // pred_region
      // Predicated region
      $region33: #{cross_attention_pallas.1} parent=31 // pred_check
        %p178 = pneg %p31
      $region34: #{cross_attention_pallas.1} parent=31 // pred_check_branch
        %180 = sbr.rel (%p178) target = $region36
      $region35: #{cross_attention_pallas.1} parent=31 // pred_region
        %p181 = scmp.lt.s32.totalorder %s11, 1
        %s182 = scalar_select %p181, %s11, 1
        %s183 = smul.addr %s182, 8
        %s184 = smul.addr %s183, 8
        %s185 = scalar_lea.vmem %s0, %s184
      $region36: #{cross_attention_pallas.1} parent=31 // pred_fallthru
        _
    $region32: #{cross_attention_pallas.1} parent=5 // pred_fallthru
      _
    %p186 = scmp.le.s32.totalorder 1, %s11
    %p187 = scmp.lt.s32.totalorder %s11, 3
    %p188 = pnand %p186, %p187
    %p189 = pneg %p188
    // Predicated region
    $region37: #{cross_attention_pallas.1} parent=5 // pred_check
      _
    $region38: #{cross_attention_pallas.1} parent=5 // pred_check_branch
      %191 = sbr.rel (%p188) target = $region40
    $region39: #{cross_attention_pallas.1} parent=5 // pred_region
      %s192 = ssub.s32 %s11, 1
      %p193 = scmp.lt.s32.totalorder %s16, 1
      %s194 = scalar_select %p193, %s16, 1
      %s195 = smul.addr %s194, 8
      %s196 = smul.addr %s195, 8
      %s197 = scalar_lea.vmem %s0, %s196
      %p198 = pneg %p37
      %p199 = pneg %p34
      %p200 = pneg %p58
      %p201 = pneg %p55
      %p202 = pneg %p79
      %p203 = pneg %p76
      %p204 = pneg %p100
      %p205 = pneg %p97
      %p206 = pneg %p121
      %p207 = pneg %p118
      %p208 = pneg %p147
      %p209 = pneg %p144
      %p210 = scmp.lt.s32.totalorder %s16, 1
      %s211 = scalar_select %p210, %s16, 1
      %s212 = smul.addr %s211, 8
      %s213 = smul.addr %s212, 8
      %s214 = scalar_lea.vmem %s5, %s213
      %p215 = scmp.lt.s32.totalorder %s16, 1
      %s216 = scalar_select %p215, %s16, 1
      %s217 = smul.addr %s216, 8
      %s218 = smul.addr %s217, 8
      %s219 = scalar_lea.vmem %s0, %s218
      %p220 = scmp.lt.s32.totalorder %s16, 1
      %s221 = scalar_select %p220, %s16, 1
      %s222 = smul.addr %s221, 8
      %s223 = smul.addr %s222, 8
      %s224 = scalar_lea.vmem %s5, %s223
      %v225 = vld [vmem:[%s219] sm:$0xff]
      %v226 = vld [vmem:[%s219 + $0x8] sm:$0xff]
      %v227 = vld [vmem:[%s219 + $0x10] sm:$0xff]
      %v228 = vld [vmem:[%s219 + $0x18] sm:$0xff]
      %v229 = vld [vmem:[%s219 + $0x20] sm:$0xff]
      %v230 = vld [vmem:[%s219 + $0x28] sm:$0xff]
      %v231 = vld [vmem:[%s219 + $0x30] sm:$0xff]
      %v232 = vld [vmem:[%s219 + $0x38] sm:$0xff]
      %v233 = vld [vmem:[%s1] sm:$0x1]
      %v234 = vld [vmem:[%s1 + $0x1] sm:$0x1]
      %vm235 = vcmask 261120
      %v236 = vsel %vm235, %v225, 0.0
      %237 = vadd.xlane.f32.xlu0 %v236
      %v238 = vpop.xlane.xlu0 %237
      %v239 = vsel %vm235, %v226, 0.0
      %240 = vadd.xlane.f32.xlu0 %v239
      %v241 = vpop.xlane.xlu0 %240
      %v242 = vsel %vm235, %v227, 0.0
      %243 = vadd.xlane.f32.xlu0 %v242
      %v244 = vpop.xlane.xlu0 %243
      %v245 = vsel %vm235, %v228, 0.0
      %246 = vadd.xlane.f32.xlu0 %v245
      %v247 = vpop.xlane.xlu0 %246
      %v248 = vsel %vm235, %v229, 0.0
      %249 = vadd.xlane.f32.xlu0 %v248
      %v250 = vpop.xlane.xlu0 %249
      %v251 = vsel %vm235, %v230, 0.0
      %252 = vadd.xlane.f32.xlu0 %v251
      %v253 = vpop.xlane.xlu0 %252
      %v254 = vsel %vm235, %v231, 0.0
      %255 = vadd.xlane.f32.xlu0 %v254
      %v256 = vpop.xlane.xlu0 %255
      %v257 = vsel %vm235, %v232, 0.0
      %258 = vadd.xlane.f32.xlu0 %v257
      %v259 = vpop.xlane.xlu0 %258
      %v260 = vrcp.pop 32.0
      %v261 = vmul.f32 %v238, %v260
      %v262 = vmul.f32 %v241, %v260
      %v263 = vmul.f32 %v244, %v260
      %v264 = vmul.f32 %v247, %v260
      %v265 = vmul.f32 %v250, %v260
      %v266 = vmul.f32 %v253, %v260
      %v267 = vmul.f32 %v256, %v260
      %v268 = vmul.f32 %v259, %v260
      %v269 = vsub.f32 %v225, %v261
      %v270 = vsub.f32 %v226, %v262
      %v271 = vsub.f32 %v227, %v263
      %v272 = vsub.f32 %v228, %v264
      %v273 = vsub.f32 %v229, %v265
      %v274 = vsub.f32 %v230, %v266
      %v275 = vsub.f32 %v231, %v267
      %v276 = vsub.f32 %v232, %v268
      %v277 = vmul.f32 %v269, %v269
      %v278 = vmul.f32 %v270, %v270
      %v279 = vmul.f32 %v271, %v271
      %v280 = vmul.f32 %v272, %v272
      %v281 = vmul.f32 %v273, %v273
      %v282 = vmul.f32 %v274, %v274
      %v283 = vmul.f32 %v275, %v275
      %v284 = vmul.f32 %v276, %v276
      %v285 = vsel %vm235, %v277, 0.0
      %286 = vadd.xlane.f32.xlu0 %v285
      %v287 = vpop.xlane.xlu0 %286
      %v288 = vsel %vm235, %v278, 0.0
      %289 = vadd.xlane.f32.xlu0 %v288
      %v290 = vpop.xlane.xlu0 %289
      %v291 = vsel %vm235, %v279, 0.0
      %292 = vadd.xlane.f32.xlu0 %v291
      %v293 = vpop.xlane.xlu0 %292
      %v294 = vsel %vm235, %v280, 0.0
      %295 = vadd.xlane.f32.xlu0 %v294
      %v296 = vpop.xlane.xlu0 %295
      %v297 = vsel %vm235, %v281, 0.0
      %298 = vadd.xlane.f32.xlu0 %v297
      %v299 = vpop.xlane.xlu0 %298
      %v300 = vsel %vm235, %v282, 0.0
      %301 = vadd.xlane.f32.xlu0 %v300
      %v302 = vpop.xlane.xlu0 %301
      %v303 = vsel %vm235, %v283, 0.0
      %304 = vadd.xlane.f32.xlu0 %v303
      %v305 = vpop.xlane.xlu0 %304
      %v306 = vsel %vm235, %v284, 0.0
      %307 = vadd.xlane.f32.xlu0 %v306
      %v308 = vpop.xlane.xlu0 %307
      %v309 = vmul.f32 %v287, %v260
      %v310 = vmul.f32 %v290, %v260
      %v311 = vmul.f32 %v293, %v260
      %v312 = vmul.f32 %v296, %v260
      %v313 = vmul.f32 %v299, %v260
      %v314 = vmul.f32 %v302, %v260
      %v315 = vmul.f32 %v305, %v260
      %v316 = vmul.f32 %v308, %v260
      %v317 = vadd.f32 %v309, 1e-05
      %v318 = vadd.f32 %v310, 1e-05
      %v319 = vadd.f32 %v311, 1e-05
      %v320 = vadd.f32 %v312, 1e-05
      %v321 = vadd.f32 %v313, 1e-05
      %v322 = vadd.f32 %v314, 1e-05
      %v323 = vadd.f32 %v315, 1e-05
      %v324 = vadd.f32 %v316, 1e-05
      %v325 = vrsqrt.pop %v317
      %v326 = vrsqrt.pop %v318
      %v327 = vrsqrt.pop %v319
      %v328 = vrsqrt.pop %v320
      %v329 = vrsqrt.pop %v321
      %v330 = vrsqrt.pop %v322
      %v331 = vrsqrt.pop %v323
      %v332 = vrsqrt.pop %v324
      %v333 = vmul.f32 %v269, %v325
      %v334 = vmul.f32 %v270, %v326
      %v335 = vmul.f32 %v271, %v327
      %v336 = vmul.f32 %v272, %v328
      %v337 = vmul.f32 %v273, %v329
      %v338 = vmul.f32 %v274, %v330
      %v339 = vmul.f32 %v275, %v331
      %v340 = vmul.f32 %v276, %v332
      %v341 = vlaneseq
      %v342 = vshrl.u32 %v341, 7
      %v343 = vsub.s32 0, %v342
      %v344 = vrot.slane %v233, %v343
      %v345 = vmul.f32 %v333, %v344
      %v346 = vmul.f32 %v334, %v344
      %v347 = vmul.f32 %v335, %v344
      %v348 = vmul.f32 %v336, %v344
      %v349 = vmul.f32 %v337, %v344
      %v350 = vmul.f32 %v338, %v344
      %v351 = vmul.f32 %v339, %v344
      %v352 = vmul.f32 %v340, %v344
      %v353 = vlaneseq
      %v354 = vshrl.u32 %v353, 7
      %v355 = vsub.s32 0, %v354
      %v356 = vrot.slane %v234, %v355
      %v357 = vadd.f32 %v345, %v356
      %v358 = vadd.f32 %v346, %v356
      %v359 = vadd.f32 %v347, %v356
      %v360 = vadd.f32 %v348, %v356
      %v361 = vadd.f32 %v349, %v356
      %v362 = vadd.f32 %v350, %v356
      %v363 = vadd.f32 %v351, %v356
      %v364 = vadd.f32 %v352, %v356
      %v365 = vld [vmem:[%s2] sm:$0xff]
      %v366 = vld [vmem:[%s2 + $0x8] sm:$0xff]
      %v367 = vld [vmem:[%s2 + $0x10] sm:$0xff]
      %v368 = vld [vmem:[%s2 + $0x18] sm:$0xff]
      %v370 = vsel %vm235, %v357, 0
      %v373 = vsel %vm235, %v358, 0
      %v376 = vsel %vm235, %v359, 0
      %v379 = vsel %vm235, %v360, 0
      %v382 = vsel %vm235, %v361, 0
      %v385 = vsel %vm235, %v362, 0
      %v388 = vsel %vm235, %v363, 0
      %v391 = vsel %vm235, %v364, 0
      %393 = vmatprep.subr.mxu0 0.0
      %394 = vmatpush1.msra.mxu0 %v365
      %395 = vmatprep.subr.mxu0 0.0
      %396 = vmatpush1.msra.mxu0 %v366
      %397 = vmatprep.subr.mxu0 0.0
      %398 = vmatpush1.msra.mxu0 %v367
      %399 = vmatprep.subr.mxu0 0.0
      %400 = vmatpush1.msra.mxu0 %v368
      %401 = vmatprep.subr.mxu0 0.0
      %402 = vmatpush1.msra.mxu0 0.0
      %403 = vmatprep.subr.mxu0 0.0
      %404 = vmatpush1.msra.mxu0 0.0
      %405 = vmatprep.subr.mxu0 0.0
      %406 = vmatpush1.msra.mxu0 0.0
      %407 = vmatprep.subr.mxu0 0.0
      %408 = vmatpush1.msra.mxu0 0.0
      %409 = vmatprep.subr.mxu0 0.0
      %410 = vmatpush1.msra.mxu0 0.0
      %411 = vmatprep.subr.mxu0 0.0
      %412 = vmatpush1.msra.mxu0 0.0
      %413 = vmatprep.subr.mxu0 0.0
      %414 = vmatpush1.msra.mxu0 0.0
      %415 = vmatprep.subr.mxu0 0.0
      %416 = vmatpush1.msra.mxu0 0.0
      %417 = vmatprep.subr.mxu0 0.0
      %418 = vmatpush1.msra.mxu0 0.0
      %419 = vmatprep.subr.mxu0 0.0
      %420 = vmatpush1.msra.mxu0 0.0
      %421 = vmatprep.subr.mxu0 0.0
      %422 = vmatpush1.msra.mxu0 0.0
      %423 = vmatprep.subr.mxu0 0.0
      %424 = vmatpush1.msra.mxu0 0.0
      %425 = vmatprep.subr.mxu0 0.0
      %426 = vmatpush1.msra.mxu0 0.0
      %427 = vmatprep.subr.mxu0 0.0
      %428 = vmatpush1.msra.mxu0 0.0
      %429 = vmatprep.subr.mxu0 0.0
      %430 = vmatpush1.msra.mxu0 0.0
      %431 = vmatprep.subr.mxu0 0.0
      %432 = vmatpush1.msra.mxu0 0.0
      %433 = vmatprep.subr.mxu0 0.0
      %434 = vmatpush1.msra.mxu0 0.0
      %435 = vmatprep.subr.mxu0 0.0
      %436 = vmatpush1.msra.mxu0 0.0
      %437 = vmatprep.subr.mxu0 0.0
      %438 = vmatpush1.msra.mxu0 0.0
      %439 = vmatprep.subr.mxu0 0.0
      %440 = vmatpush1.msra.mxu0 0.0
      %441 = vmatprep.subr.mxu0 0.0
      %442 = vmatpush1.msra.mxu0 0.0
      %443 = vmatprep.subr.mxu0 0.0
      %444 = vmatpush1.msra.mxu0 0.0
      %445 = vmatprep.subr.mxu0 0.0
      %446 = vmatpush1.msra.mxu0 0.0
      %447 = vmatprep.subr.mxu0 0.0
      %448 = vmatpush1.msra.mxu0 0.0
      %449 = vmatprep.subr.mxu0 0.0
      %450 = vmatpush1.msra.mxu0 0.0
      %451 = vmatprep.subr.mxu0 0.0
      %452 = vmatpush1.msra.mxu0 0.0
      %453 = vmatprep.subr.mxu0 0.0
      %454 = vmatpush1.msra.mxu0 0.0
      %455 = vmatprep.subr.mxu0 0.0
      %456 = vmatpush1.msra.mxu0 0.0
      %457 = vmatprep.mubr.f32.mxu0 0.0
      %458 = vmatmul.mubr.f32.gmra.mrb[0].mxu0 %v370
      %v459 = vpop.f32.mrb[0].mxu0
      %v460 = vadd.f32 0.0, %v459
      %v461 = vpop.f32.mrb[0].mxu0
      %462 = vmatprep.mubr.f32.mxu0 0.0
      %463 = vmatmul.mubr.f32.gmra.mrb[0].mxu0 %v373
      %v464 = vpop.f32.mrb[0].mxu0
      %v465 = vadd.f32 0.0, %v464
      %v466 = vpop.f32.mrb[0].mxu0
      %467 = vmatprep.mubr.f32.mxu0 0.0
      %468 = vmatmul.mubr.f32.gmra.mrb[0].mxu0 %v376
      %v469 = vpop.f32.mrb[0].mxu0
      %v470 = vadd.f32 0.0, %v469
      %v471 = vpop.f32.mrb[0].mxu0
      %472 = vmatprep.mubr.f32.mxu0 0.0
      %473 = vmatmul.mubr.f32.gmra.mrb[0].mxu0 %v379
      %v474 = vpop.f32.mrb[0].mxu0
      %v475 = vadd.f32 0.0, %v474
      %v476 = vpop.f32.mrb[0].mxu0
      %477 = vmatprep.mubr.f32.mxu0 0.0
      %478 = vmatmul.mubr.f32.gmra.mrb[0].mxu0 %v382
      %v479 = vpop.f32.mrb[0].mxu0
      %v480 = vadd.f32 0.0, %v479
      %v481 = vpop.f32.mrb[0].mxu0
      %482 = vmatprep.mubr.f32.mxu0 0.0
      %483 = vmatmul.mubr.f32.gmra.mrb[0].mxu0 %v385
      %v484 = vpop.f32.mrb[0].mxu0
      %v485 = vadd.f32 0.0, %v484
      %v486 = vpop.f32.mrb[0].mxu0
      %487 = vmatprep.mubr.f32.mxu0 0.0
      %488 = vmatmul.mubr.f32.gmra.mrb[0].mxu0 %v388
      %v489 = vpop.f32.mrb[0].mxu0
      %v490 = vadd.f32 0.0, %v489
      %v491 = vpop.f32.mrb[0].mxu0
      %492 = vmatprep.mubr.f32.mxu0 0.0
      %493 = vmatmul.mubr.f32.gmra.mrb[0].mxu0 %v391
      %v494 = vpop.f32.mrb[0].mxu0
      %v495 = vadd.f32 0.0, %v494
      %v496 = vpop.f32.mrb[0].mxu0
      %497 = vdwg.mxu0
      %v498 = vld [vmem:[%s3] sm:$0xff]
      %v499 = vld [vmem:[%s3 + $0x8] sm:$0xff]
      %v500 = vld [vmem:[%s3 + $0x10] sm:$0xff]
      %v501 = vld [vmem:[%s3 + $0x18] sm:$0xff]
      %v502 = vld [vmem:[%s3 + $0x20] sm:$0xff]
      %v503 = vld [vmem:[%s3 + $0x28] sm:$0xff]
      %v504 = vld [vmem:[%s3 + $0x30] sm:$0xff]
      %v505 = vld [vmem:[%s3 + $0x38] sm:$0xff]
      %vm506 = vcmask 523264
      %v508 = vsel %vm506, %v460, 0
      %v511 = vsel %vm506, %v465, 0
      %v514 = vsel %vm506, %v470, 0
      %v517 = vsel %vm506, %v475, 0
      %v520 = vsel %vm506, %v480, 0
      %v523 = vsel %vm506, %v485, 0
      %v526 = vsel %vm506, %v490, 0
      %v529 = vsel %vm506, %v495, 0
      %531 = vmatprep.subr.mxu0 0.0
      %532 = vmatpush1.msra.mxu0 %v498
      %533 = vmatprep.subr.mxu0 0.0
      %534 = vmatpush1.msra.mxu0 %v499
      %535 = vmatprep.subr.mxu0 0.0
      %536 = vmatpush1.msra.mxu0 %v500
      %537 = vmatprep.subr.mxu0 0.0
      %538 = vmatpush1.msra.mxu0 %v501
      %539 = vmatprep.subr.mxu0 0.0
      %540 = vmatpush1.msra.mxu0 %v502
      %541 = vmatprep.subr.mxu0 0.0
      %542 = vmatpush1.msra.mxu0 %v503
      %543 = vmatprep.subr.mxu0 0.0
      %544 = vmatpush1.msra.mxu0 %v504
      %545 = vmatprep.subr.mxu0 0.0
      %546 = vmatpush1.msra.mxu0 %v505
      %547 = vmatprep.subr.mxu0 0.0
      %548 = vmatpush1.msra.mxu0 0.0
      %549 = vmatprep.subr.mxu0 0.0
      %550 = vmatpush1.msra.mxu0 0.0
      %551 = vmatprep.subr.mxu0 0.0
      %552 = vmatpush1.msra.mxu0 0.0
      %553 = vmatprep.subr.mxu0 0.0
      %554 = vmatpush1.msra.mxu0 0.0
      %555 = vmatprep.subr.mxu0 0.0
      %556 = vmatpush1.msra.mxu0 0.0
      %557 = vmatprep.subr.mxu0 0.0
      %558 = vmatpush1.msra.mxu0 0.0
      %559 = vmatprep.subr.mxu0 0.0
      %560 = vmatpush1.msra.mxu0 0.0
      %561 = vmatprep.subr.mxu0 0.0
      %562 = vmatpush1.msra.mxu0 0.0
      %563 = vmatprep.subr.mxu0 0.0
      %564 = vmatpush1.msra.mxu0 0.0
      %565 = vmatprep.subr.mxu0 0.0
      %566 = vmatpush1.msra.mxu0 0.0
      %567 = vmatprep.subr.mxu0 0.0
      %568 = vmatpush1.msra.mxu0 0.0
      %569 = vmatprep.subr.mxu0 0.0
      %570 = vmatpush1.msra.mxu0 0.0
      %571 = vmatprep.subr.mxu0 0.0
      %572 = vmatpush1.msra.mxu0 0.0
      %573 = vmatprep.subr.mxu0 0.0
      %574 = vmatpush1.msra.mxu0 0.0
      %575 = vmatprep.subr.mxu0 0.0
      %576 = vmatpush1.msra.mxu0 0.0
      %577 = vmatprep.subr.mxu0 0.0
      %578 = vmatpush1.msra.mxu0 0.0
      %579 = vmatprep.subr.mxu0 0.0
      %580 = vmatpush1.msra.mxu0 0.0
      %581 = vmatprep.subr.mxu0 0.0
      %582 = vmatpush1.msra.mxu0 0.0
      %583 = vmatprep.subr.mxu0 0.0
      %584 = vmatpush1.msra.mxu0 0.0
      %585 = vmatprep.subr.mxu0 0.0
      %586 = vmatpush1.msra.mxu0 0.0
      %587 = vmatprep.subr.mxu0 0.0
      %588 = vmatpush1.msra.mxu0 0.0
      %589 = vmatprep.subr.mxu0 0.0
      %590 = vmatpush1.msra.mxu0 0.0
      %591 = vmatprep.subr.mxu0 0.0
      %592 = vmatpush1.msra.mxu0 0.0
      %593 = vmatprep.subr.mxu0 0.0
      %594 = vmatpush1.msra.mxu0 0.0
      %595 = vmatprep.mubr.f32.mxu0 0.0
      %596 = vmatmul.mubr.f32.gmra.mrb[0].mxu0 %v508
      %v597 = vpop.f32.mrb[0].mxu0
      %v598 = vadd.f32 0.0, %v597
      %v599 = vpop.f32.mrb[0].mxu0
      %600 = vmatprep.mubr.f32.mxu0 0.0
      %601 = vmatmul.mubr.f32.gmra.mrb[0].mxu0 %v511
      %v602 = vpop.f32.mrb[0].mxu0
      %v603 = vadd.f32 0.0, %v602
      %v604 = vpop.f32.mrb[0].mxu0
      %605 = vmatprep.mubr.f32.mxu0 0.0
      %606 = vmatmul.mubr.f32.gmra.mrb[0].mxu0 %v514
      %v607 = vpop.f32.mrb[0].mxu0
      %v608 = vadd.f32 0.0, %v607
      %v609 = vpop.f32.mrb[0].mxu0
      %610 = vmatprep.mubr.f32.mxu0 0.0
      %611 = vmatmul.mubr.f32.gmra.mrb[0].mxu0 %v517
      %v612 = vpop.f32.mrb[0].mxu0
      %v613 = vadd.f32 0.0, %v612
      %v614 = vpop.f32.mrb[0].mxu0
      %615 = vmatprep.mubr.f32.mxu0 0.0
      %616 = vmatmul.mubr.f32.gmra.mrb[0].mxu0 %v520
      %v617 = vpop.f32.mrb[0].mxu0
      %v618 = vadd.f32 0.0, %v617
      %v619 = vpop.f32.mrb[0].mxu0
      %620 = vmatprep.mubr.f32.mxu0 0.0
      %621 = vmatmul.mubr.f32.gmra.mrb[0].mxu0 %v523
      %v622 = vpop.f32.mrb[0].mxu0
      %v623 = vadd.f32 0.0, %v622
      %v624 = vpop.f32.mrb[0].mxu0
      %625 = vmatprep.mubr.f32.mxu0 0.0
      %626 = vmatmul.mubr.f32.gmra.mrb[0].mxu0 %v526
      %v627 = vpop.f32.mrb[0].mxu0
      %v628 = vadd.f32 0.0, %v627
      %v629 = vpop.f32.mrb[0].mxu0
      %630 = vmatprep.mubr.f32.mxu0 0.0
      %631 = vmatmul.mubr.f32.gmra.mrb[0].mxu0 %v529
      %v632 = vpop.f32.mrb[0].mxu0
      %v633 = vadd.f32 0.0, %v632
      %v634 = vpop.f32.mrb[0].mxu0
      %635 = vdwg.mxu0
      %v636 = vmul.f32 %v460, 0.25
      %v637 = vmul.f32 %v465, 0.25
      %v638 = vmul.f32 %v470, 0.25
      %v639 = vmul.f32 %v475, 0.25
      %v640 = vmul.f32 %v480, 0.25
      %v641 = vmul.f32 %v485, 0.25
      %v642 = vmul.f32 %v490, 0.25
      %v643 = vmul.f32 %v495, 0.25
      %vm644 = vcmask 130048
      %v646 = vsel %vm644, %v636, 0
      %v649 = vsel %vm644, %v637, 0
      %v652 = vsel %vm644, %v638, 0
      %v655 = vsel %vm644, %v639, 0
      %v658 = vsel %vm644, %v640, 0
      %v661 = vsel %vm644, %v641, 0
      %v664 = vsel %vm644, %v642, 0
      %v667 = vsel %vm644, %v643, 0
      %v670 = vsel %vm644, %v598, 0
      %v673 = vsel %vm644, %v603, 0
      %v676 = vsel %vm644, %v608, 0
      %v679 = vsel %vm644, %v613, 0
      %v682 = vsel %vm644, %v618, 0
      %v685 = vsel %vm644, %v623, 0
      %v688 = vsel %vm644, %v628, 0
      %v691 = vsel %vm644, %v633, 0
      %693 = vmatprep.subr.mxu0 0.0
      %694 = vmatpush1.xpose.msra.mxu0 %v670
      %695 = vmatprep.subr.mxu0 0.0
      %696 = vmatpush1.xpose.msra.mxu0 %v673
      %697 = vmatprep.subr.mxu0 0.0
      %698 = vmatpush1.xpose.msra.mxu0 %v676
      %699 = vmatprep.subr.mxu0 0.0
      %700 = vmatpush1.xpose.msra.mxu0 %v679
      %701 = vmatprep.subr.mxu0 0.0
      %702 = vmatpush1.xpose.msra.mxu0 %v682
      %703 = vmatprep.subr.mxu0 0.0
      %704 = vmatpush1.xpose.msra.mxu0 %v685
      %705 = vmatprep.subr.mxu0 0.0
      %706 = vmatpush1.xpose.msra.mxu0 %v688
      %707 = vmatprep.subr.mxu0 0.0
      %708 = vmatpush1.xpose.msra.mxu0 %v691
      %709 = vmatprep.subr.mxu0 0.0
      %710 = vmatpush1.xpose.msra.mxu0 0.0
      %711 = vmatprep.subr.mxu0 0.0
      %712 = vmatpush1.xpose.msra.mxu0 0.0
      %713 = vmatprep.subr.mxu0 0.0
      %714 = vmatpush1.xpose.msra.mxu0 0.0
      %715 = vmatprep.subr.mxu0 0.0
      %716 = vmatpush1.xpose.msra.mxu0 0.0
      %717 = vmatprep.subr.mxu0 0.0
      %718 = vmatpush1.xpose.msra.mxu0 0.0
      %719 = vmatprep.subr.mxu0 0.0
      %720 = vmatpush1.xpose.msra.mxu0 0.0
      %721 = vmatprep.subr.mxu0 0.0
      %722 = vmatpush1.xpose.msra.mxu0 0.0
      %723 = vmatprep.subr.mxu0 0.0
      %724 = vmatpush1.xpose.msra.mxu0 0.0
      %725 = vmatprep.subr.mxu0 0.0
      %726 = vmatpush1.xpose.msra.mxu0 0.0
      %727 = vmatprep.subr.mxu0 0.0
      %728 = vmatpush1.xpose.msra.mxu0 0.0
      %729 = vmatprep.subr.mxu0 0.0
      %730 = vmatpush1.xpose.msra.mxu0 0.0
      %731 = vmatprep.subr.mxu0 0.0
      %732 = vmatpush1.xpose.msra.mxu0 0.0
      %733 = vmatprep.subr.mxu0 0.0
      %734 = vmatpush1.xpose.msra.mxu0 0.0
      %735 = vmatprep.subr.mxu0 0.0
      %736 = vmatpush1.xpose.msra.mxu0 0.0
      %737 = vmatprep.subr.mxu0 0.0
      %738 = vmatpush1.xpose.msra.mxu0 0.0
      %739 = vmatprep.subr.mxu0 0.0
      %740 = vmatpush1.xpose.msra.mxu0 0.0
      %741 = vmatprep.subr.mxu0 0.0
      %742 = vmatpush1.xpose.msra.mxu0 0.0
      %743 = vmatprep.subr.mxu0 0.0
      %744 = vmatpush1.xpose.msra.mxu0 0.0
      %745 = vmatprep.subr.mxu0 0.0
      %746 = vmatpush1.xpose.msra.mxu0 0.0
      %747 = vmatprep.subr.mxu0 0.0
      %748 = vmatpush1.xpose.msra.mxu0 0.0
      %749 = vmatprep.subr.mxu0 0.0
      %750 = vmatpush1.xpose.msra.mxu0 0.0
      %751 = vmatprep.subr.mxu0 0.0
      %752 = vmatpush1.xpose.msra.mxu0 0.0
      %753 = vmatprep.subr.mxu0 0.0
      %754 = vmatpush1.xpose.msra.mxu0 0.0
      %755 = vmatprep.subr.mxu0 0.0
      %756 = vmatpush1.xpose.msra.mxu0 0.0
      %757 = vmatprep.mubr.f32.mxu0 0.0
      %758 = vmatmul.mubr.f32.gmra.mrb[0].mxu0 %v646
      %v759 = vpop.f32.mrb[0].mxu0
      %v760 = vadd.f32 0.0, %v759
      %v761 = vpop.f32.mrb[0].mxu0
      %762 = vmatprep.mubr.f32.mxu0 0.0
      %763 = vmatmul.mubr.f32.gmra.mrb[0].mxu0 %v649
      %v764 = vpop.f32.mrb[0].mxu0
      %v765 = vadd.f32 0.0, %v764
      %v766 = vpop.f32.mrb[0].mxu0
      %767 = vmatprep.mubr.f32.mxu0 0.0
      %768 = vmatmul.mubr.f32.gmra.mrb[0].mxu0 %v652
      %v769 = vpop.f32.mrb[0].mxu0
      %v770 = vadd.f32 0.0, %v769
      %v771 = vpop.f32.mrb[0].mxu0
      %772 = vmatprep.mubr.f32.mxu0 0.0
      %773 = vmatmul.mubr.f32.gmra.mrb[0].mxu0 %v655
      %v774 = vpop.f32.mrb[0].mxu0
      %v775 = vadd.f32 0.0, %v774
      %v776 = vpop.f32.mrb[0].mxu0
      %777 = vmatprep.mubr.f32.mxu0 0.0
      %778 = vmatmul.mubr.f32.gmra.mrb[0].mxu0 %v658
      %v779 = vpop.f32.mrb[0].mxu0
      %v780 = vadd.f32 0.0, %v779
      %v781 = vpop.f32.mrb[0].mxu0
      %782 = vmatprep.mubr.f32.mxu0 0.0
      %783 = vmatmul.mubr.f32.gmra.mrb[0].mxu0 %v661
      %v784 = vpop.f32.mrb[0].mxu0
      %v785 = vadd.f32 0.0, %v784
      %v786 = vpop.f32.mrb[0].mxu0
      %787 = vmatprep.mubr.f32.mxu0 0.0
      %788 = vmatmul.mubr.f32.gmra.mrb[0].mxu0 %v664
      %v789 = vpop.f32.mrb[0].mxu0
      %v790 = vadd.f32 0.0, %v789
      %v791 = vpop.f32.mrb[0].mxu0
      %792 = vmatprep.mubr.f32.mxu0 0.0
      %793 = vmatmul.mubr.f32.gmra.mrb[0].mxu0 %v667
      %v794 = vpop.f32.mrb[0].mxu0
      %v795 = vadd.f32 0.0, %v794
      %v796 = vpop.f32.mrb[0].mxu0
      %797 = vdwg.mxu0
      %v798 = vsel %vm506, %v760, -inf
      %799 = vmax.xlane.f32.xlu0 %v798
      %v800 = vpop.xlane.xlu0 %799
      %v801 = vsel %vm506, %v765, -inf
      %802 = vmax.xlane.f32.xlu0 %v801
      %v803 = vpop.xlane.xlu0 %802
      %v804 = vsel %vm506, %v770, -inf
      %805 = vmax.xlane.f32.xlu0 %v804
      %v806 = vpop.xlane.xlu0 %805
      %v807 = vsel %vm506, %v775, -inf
      %808 = vmax.xlane.f32.xlu0 %v807
      %v809 = vpop.xlane.xlu0 %808
      %v810 = vsel %vm506, %v780, -inf
      %811 = vmax.xlane.f32.xlu0 %v810
      %v812 = vpop.xlane.xlu0 %811
      %v813 = vsel %vm506, %v785, -inf
      %814 = vmax.xlane.f32.xlu0 %v813
      %v815 = vpop.xlane.xlu0 %814
      %v816 = vsel %vm506, %v790, -inf
      %817 = vmax.xlane.f32.xlu0 %v816
      %v818 = vpop.xlane.xlu0 %817
      %v819 = vsel %vm506, %v795, -inf
      %820 = vmax.xlane.f32.xlu0 %v819
      %v821 = vpop.xlane.xlu0 %820
      %v822 = vsub.f32 %v760, %v800
      %v823 = vsub.f32 %v765, %v803
      %v824 = vsub.f32 %v770, %v806
      %v825 = vsub.f32 %v775, %v809
      %v826 = vsub.f32 %v780, %v812
      %v827 = vsub.f32 %v785, %v815
      %v828 = vsub.f32 %v790, %v818
      %v829 = vsub.f32 %v795, %v821
      %v830 = vmul.f32 %v822, 1.442695
      %v831 = vpow.pop %v830
      %v832 = vmul.f32 %v823, 1.442695
      %v833 = vpow.pop %v832
      %v834 = vmul.f32 %v824, 1.442695
      %v835 = vpow.pop %v834
      %v836 = vmul.f32 %v825, 1.442695
      %v837 = vpow.pop %v836
      %v838 = vmul.f32 %v826, 1.442695
      %v839 = vpow.pop %v838
      %v840 = vmul.f32 %v827, 1.442695
      %v841 = vpow.pop %v840
      %v842 = vmul.f32 %v828, 1.442695
      %v843 = vpow.pop %v842
      %v844 = vmul.f32 %v829, 1.442695
      %v845 = vpow.pop %v844
      %v846 = vsel %vm506, %v831, 0.0
      %847 = vadd.xlane.f32.xlu0 %v846
      %v848 = vpop.xlane.xlu0 %847
      %v849 = vsel %vm506, %v833, 0.0
      %850 = vadd.xlane.f32.xlu0 %v849
      %v851 = vpop.xlane.xlu0 %850
      %v852 = vsel %vm506, %v835, 0.0
      %853 = vadd.xlane.f32.xlu0 %v852
      %v854 = vpop.xlane.xlu0 %853
      %v855 = vsel %vm506, %v837, 0.0
      %856 = vadd.xlane.f32.xlu0 %v855
      %v857 = vpop.xlane.xlu0 %856
      %v858 = vsel %vm506, %v839, 0.0
      %859 = vadd.xlane.f32.xlu0 %v858
      %v860 = vpop.xlane.xlu0 %859
      %v861 = vsel %vm506, %v841, 0.0
      %862 = vadd.xlane.f32.xlu0 %v861
      %v863 = vpop.xlane.xlu0 %862
      %v864 = vsel %vm506, %v843, 0.0
      %865 = vadd.xlane.f32.xlu0 %v864
      %v866 = vpop.xlane.xlu0 %865
      %v867 = vsel %vm506, %v845, 0.0
      %868 = vadd.xlane.f32.xlu0 %v867
      %v869 = vpop.xlane.xlu0 %868
      %v870 = vrcp.pop %v848
      %v871 = vrcp.pop %v851
      %v872 = vrcp.pop %v854
      %v873 = vrcp.pop %v857
      %v874 = vrcp.pop %v860
      %v875 = vrcp.pop %v863
      %v876 = vrcp.pop %v866
      %v877 = vrcp.pop %v869
      %v878 = vmul.f32 %v831, %v870
      %v879 = vmul.f32 %v833, %v871
      %v880 = vmul.f32 %v835, %v872
      %v881 = vmul.f32 %v837, %v873
      %v882 = vmul.f32 %v839, %v874
      %v883 = vmul.f32 %v841, %v875
      %v884 = vmul.f32 %v843, %v876
      %v885 = vmul.f32 %v845, %v877
      %886 = vrot.lane.b32.xlu0 %v598, 64
      %v887 = vpop.permute.xlu0 %886
      %888 = vrot.lane.b32.xlu0 %v603, 64
      %v889 = vpop.permute.xlu0 %888
      %890 = vrot.lane.b32.xlu0 %v608, 64
      %v891 = vpop.permute.xlu0 %890
      %892 = vrot.lane.b32.xlu0 %v613, 64
      %v893 = vpop.permute.xlu0 %892
      %894 = vrot.lane.b32.xlu0 %v618, 64
      %v895 = vpop.permute.xlu0 %894
      %896 = vrot.lane.b32.xlu0 %v623, 64
      %v897 = vpop.permute.xlu0 %896
      %898 = vrot.lane.b32.xlu0 %v628, 64
      %v899 = vpop.permute.xlu0 %898
      %900 = vrot.lane.b32.xlu0 %v633, 64
      %v901 = vpop.permute.xlu0 %900
      %v911 = vsel %vm506, %v878, 0
      %v914 = vsel %vm506, %v879, 0
      %v917 = vsel %vm506, %v880, 0
      %v920 = vsel %vm506, %v881, 0
      %v923 = vsel %vm506, %v882, 0
      %v926 = vsel %vm506, %v883, 0
      %v929 = vsel %vm506, %v884, 0
      %v932 = vsel %vm506, %v885, 0
      %934 = vmatprep.subr.mxu0 0.0
      %935 = vmatpush1.msra.mxu0 %v887
      %936 = vmatprep.subr.mxu0 0.0
      %937 = vmatpush1.msra.mxu0 %v889
      %938 = vmatprep.subr.mxu0 0.0
      %939 = vmatpush1.msra.mxu0 %v891
      %940 = vmatprep.subr.mxu0 0.0
      %941 = vmatpush1.msra.mxu0 %v893
      %942 = vmatprep.subr.mxu0 0.0
      %943 = vmatpush1.msra.mxu0 %v895
      %944 = vmatprep.subr.mxu0 0.0
      %945 = vmatpush1.msra.mxu0 %v897
      %946 = vmatprep.subr.mxu0 0.0
      %947 = vmatpush1.msra.mxu0 %v899
      %948 = vmatprep.subr.mxu0 0.0
      %949 = vmatpush1.msra.mxu0 %v901
      %950 = vmatprep.subr.mxu0 0.0
      %951 = vmatpush1.msra.mxu0 0.0
      %952 = vmatprep.subr.mxu0 0.0
      %953 = vmatpush1.msra.mxu0 0.0
      %954 = vmatprep.subr.mxu0 0.0
      %955 = vmatpush1.msra.mxu0 0.0
      %956 = vmatprep.subr.mxu0 0.0
      %957 = vmatpush1.msra.mxu0 0.0
      %958 = vmatprep.subr.mxu0 0.0
      %959 = vmatpush1.msra.mxu0 0.0
      %960 = vmatprep.subr.mxu0 0.0
      %961 = vmatpush1.msra.mxu0 0.0
      %962 = vmatprep.subr.mxu0 0.0
      %963 = vmatpush1.msra.mxu0 0.0
      %964 = vmatprep.subr.mxu0 0.0
      %965 = vmatpush1.msra.mxu0 0.0
      %966 = vmatprep.subr.mxu0 0.0
      %967 = vmatpush1.msra.mxu0 0.0
      %968 = vmatprep.subr.mxu0 0.0
      %969 = vmatpush1.msra.mxu0 0.0
      %970 = vmatprep.subr.mxu0 0.0
      %971 = vmatpush1.msra.mxu0 0.0
      %972 = vmatprep.subr.mxu0 0.0
      %973 = vmatpush1.msra.mxu0 0.0
      %974 = vmatprep.subr.mxu0 0.0
      %975 = vmatpush1.msra.mxu0 0.0
      %976 = vmatprep.subr.mxu0 0.0
      %977 = vmatpush1.msra.mxu0 0.0
      %978 = vmatprep.subr.mxu0 0.0
      %979 = vmatpush1.msra.mxu0 0.0
      %980 = vmatprep.subr.mxu0 0.0
      %981 = vmatpush1.msra.mxu0 0.0
      %982 = vmatprep.subr.mxu0 0.0
      %983 = vmatpush1.msra.mxu0 0.0
      %984 = vmatprep.subr.mxu0 0.0
      %985 = vmatpush1.msra.mxu0 0.0
      %986 = vmatprep.subr.mxu0 0.0
      %987 = vmatpush1.msra.mxu0 0.0
      %988 = vmatprep.subr.mxu0 0.0
      %989 = vmatpush1.msra.mxu0 0.0
      %990 = vmatprep.subr.mxu0 0.0
      %991 = vmatpush1.msra.mxu0 0.0
      %992 = vmatprep.subr.mxu0 0.0
      %993 = vmatpush1.msra.mxu0 0.0
      %994 = vmatprep.subr.mxu0 0.0
      %995 = vmatpush1.msra.mxu0 0.0
      %996 = vmatprep.subr.mxu0 0.0
      %997 = vmatpush1.msra.mxu0 0.0
      %998 = vmatprep.mubr.f32.mxu0 0.0
      %999 = vmatmul.mubr.f32.gmra.mrb[0].mxu0 %v911
      %v1000 = vpop.f32.mrb[0].mxu0
      %v1001 = vadd.f32 0.0, %v1000
      %v1002 = vpop.f32.mrb[0].mxu0
      %1003 = vmatprep.mubr.f32.mxu0 0.0
      %1004 = vmatmul.mubr.f32.gmra.mrb[0].mxu0 %v914
      %v1005 = vpop.f32.mrb[0].mxu0
      %v1006 = vadd.f32 0.0, %v1005
      %v1007 = vpop.f32.mrb[0].mxu0
      %1008 = vmatprep.mubr.f32.mxu0 0.0
      %1009 = vmatmul.mubr.f32.gmra.mrb[0].mxu0 %v917
      %v1010 = vpop.f32.mrb[0].mxu0
      %v1011 = vadd.f32 0.0, %v1010
      %v1012 = vpop.f32.mrb[0].mxu0
      %1013 = vmatprep.mubr.f32.mxu0 0.0
      %1014 = vmatmul.mubr.f32.gmra.mrb[0].mxu0 %v920
      %v1015 = vpop.f32.mrb[0].mxu0
      %v1016 = vadd.f32 0.0, %v1015
      %v1017 = vpop.f32.mrb[0].mxu0
      %1018 = vmatprep.mubr.f32.mxu0 0.0
      %1019 = vmatmul.mubr.f32.gmra.mrb[0].mxu0 %v923
      %v1020 = vpop.f32.mrb[0].mxu0
      %v1021 = vadd.f32 0.0, %v1020
      %v1022 = vpop.f32.mrb[0].mxu0
      %1023 = vmatprep.mubr.f32.mxu0 0.0
      %1024 = vmatmul.mubr.f32.gmra.mrb[0].mxu0 %v926
      %v1025 = vpop.f32.mrb[0].mxu0
      %v1026 = vadd.f32 0.0, %v1025
      %v1027 = vpop.f32.mrb[0].mxu0
      %1028 = vmatprep.mubr.f32.mxu0 0.0
      %1029 = vmatmul.mubr.f32.gmra.mrb[0].mxu0 %v929
      %v1030 = vpop.f32.mrb[0].mxu0
      %v1031 = vadd.f32 0.0, %v1030
      %v1032 = vpop.f32.mrb[0].mxu0
      %1033 = vmatprep.mubr.f32.mxu0 0.0
      %1034 = vmatmul.mubr.f32.gmra.mrb[0].mxu0 %v932
      %v1035 = vpop.f32.mrb[0].mxu0
      %v1036 = vadd.f32 0.0, %v1035
      %v1037 = vpop.f32.mrb[0].mxu0
      %1038 = vdwg.mxu0
      %1039 = vst.msk [vmem:[#allocation2] sm:$0xff] %vm644, %v1001
      %1040 = vst.msk [vmem:[#allocation2 + $0x8] sm:$0xff] %vm644, %v1006
      %1041 = vst.msk [vmem:[#allocation2 + $0x10] sm:$0xff] %vm644, %v1011
      %1042 = vst.msk [vmem:[#allocation2 + $0x18] sm:$0xff] %vm644, %v1016
      %1043 = vst.msk [vmem:[#allocation2 + $0x20] sm:$0xff] %vm644, %v1021
      %1044 = vst.msk [vmem:[#allocation2 + $0x28] sm:$0xff] %vm644, %v1026
      %1045 = vst.msk [vmem:[#allocation2 + $0x30] sm:$0xff] %vm644, %v1031
      %1046 = vst.msk [vmem:[#allocation2 + $0x38] sm:$0xff] %vm644, %v1036
      %1047 = vrot.lane.b32.xlu0 %v636, 112
      %v1048 = vpop.permute.xlu0 %1047
      %1049 = vrot.lane.b32.xlu0 %v637, 112
      %v1050 = vpop.permute.xlu0 %1049
      %1051 = vrot.lane.b32.xlu0 %v638, 112
      %v1052 = vpop.permute.xlu0 %1051
      %1053 = vrot.lane.b32.xlu0 %v639, 112
      %v1054 = vpop.permute.xlu0 %1053
      %1055 = vrot.lane.b32.xlu0 %v640, 112
      %v1056 = vpop.permute.xlu0 %1055
      %1057 = vrot.lane.b32.xlu0 %v641, 112
      %v1058 = vpop.permute.xlu0 %1057
      %1059 = vrot.lane.b32.xlu0 %v642, 112
      %v1060 = vpop.permute.xlu0 %1059
      %1061 = vrot.lane.b32.xlu0 %v643, 112
      %v1062 = vpop.permute.xlu0 %1061
      %1063 = vrot.lane.b32.xlu0 %v598, 112
      %v1064 = vpop.permute.xlu0 %1063
      %1065 = vrot.lane.b32.xlu0 %v603, 112
      %v1066 = vpop.permute.xlu0 %1065
      %1067 = vrot.lane.b32.xlu0 %v608, 112
      %v1068 = vpop.permute.xlu0 %1067
      %1069 = vrot.lane.b32.xlu0 %v613, 112
      %v1070 = vpop.permute.xlu0 %1069
      %1071 = vrot.lane.b32.xlu0 %v618, 112
      %v1072 = vpop.permute.xlu0 %1071
      %1073 = vrot.lane.b32.xlu0 %v623, 112
      %v1074 = vpop.permute.xlu0 %1073
      %1075 = vrot.lane.b32.xlu0 %v628, 112
      %v1076 = vpop.permute.xlu0 %1075
      %1077 = vrot.lane.b32.xlu0 %v633, 112
      %v1078 = vpop.permute.xlu0 %1077
      %v1079 = vsel %vm644, %v1048, 0
      %v1081 = vsel %vm644, %v1050, 0
      %v1083 = vsel %vm644, %v1052, 0
      %v1085 = vsel %vm644, %v1054, 0
      %v1087 = vsel %vm644, %v1056, 0
      %v1089 = vsel %vm644, %v1058, 0
      %v1091 = vsel %vm644, %v1060, 0
      %v1093 = vsel %vm644, %v1062, 0
      %v1095 = vsel %vm644, %v1064, 0
      %v1097 = vsel %vm644, %v1066, 0
      %v1099 = vsel %vm644, %v1068, 0
      %v1101 = vsel %vm644, %v1070, 0
      %v1103 = vsel %vm644, %v1072, 0
      %v1105 = vsel %vm644, %v1074, 0
      %v1107 = vsel %vm644, %v1076, 0
      %v1109 = vsel %vm644, %v1078, 0
      %1111 = vmatprep.subr.mxu0 0.0
      %1112 = vmatpush1.xpose.msra.mxu0 %v1095
      %1113 = vmatprep.subr.mxu0 0.0
      %1114 = vmatpush1.xpose.msra.mxu0 %v1097
      %1115 = vmatprep.subr.mxu0 0.0
      %1116 = vmatpush1.xpose.msra.mxu0 %v1099
      %1117 = vmatprep.subr.mxu0 0.0
      %1118 = vmatpush1.xpose.msra.mxu0 %v1101
      %1119 = vmatprep.subr.mxu0 0.0
      %1120 = vmatpush1.xpose.msra.mxu0 %v1103
      %1121 = vmatprep.subr.mxu0 0.0
      %1122 = vmatpush1.xpose.msra.mxu0 %v1105
      %1123 = vmatprep.subr.mxu0 0.0
      %1124 = vmatpush1.xpose.msra.mxu0 %v1107
      %1125 = vmatprep.subr.mxu0 0.0
      %1126 = vmatpush1.xpose.msra.mxu0 %v1109
      %1127 = vmatprep.subr.mxu0 0.0
      %1128 = vmatpush1.xpose.msra.mxu0 0.0
      %1129 = vmatprep.subr.mxu0 0.0
      %1130 = vmatpush1.xpose.msra.mxu0 0.0
      %1131 = vmatprep.subr.mxu0 0.0
      %1132 = vmatpush1.xpose.msra.mxu0 0.0
      %1133 = vmatprep.subr.mxu0 0.0
      %1134 = vmatpush1.xpose.msra.mxu0 0.0
      %1135 = vmatprep.subr.mxu0 0.0
      %1136 = vmatpush1.xpose.msra.mxu0 0.0
      %1137 = vmatprep.subr.mxu0 0.0
      %1138 = vmatpush1.xpose.msra.mxu0 0.0
      %1139 = vmatprep.subr.mxu0 0.0
      %1140 = vmatpush1.xpose.msra.mxu0 0.0
      %1141 = vmatprep.subr.mxu0 0.0
      %1142 = vmatpush1.xpose.msra.mxu0 0.0
      %1143 = vmatprep.subr.mxu0 0.0
      %1144 = vmatpush1.xpose.msra.mxu0 0.0
      %1145 = vmatprep.subr.mxu0 0.0
      %1146 = vmatpush1.xpose.msra.mxu0 0.0
      %1147 = vmatprep.subr.mxu0 0.0
      %1148 = vmatpush1.xpose.msra.mxu0 0.0
      %1149 = vmatprep.subr.mxu0 0.0
      %1150 = vmatpush1.xpose.msra.mxu0 0.0
      %1151 = vmatprep.subr.mxu0 0.0
      %1152 = vmatpush1.xpose.msra.mxu0 0.0
      %1153 = vmatprep.subr.mxu0 0.0
      %1154 = vmatpush1.xpose.msra.mxu0 0.0
      %1155 = vmatprep.subr.mxu0 0.0
      %1156 = vmatpush1.xpose.msra.mxu0 0.0
      %1157 = vmatprep.subr.mxu0 0.0
      %1158 = vmatpush1.xpose.msra.mxu0 0.0
      %1159 = vmatprep.subr.mxu0 0.0
      %1160 = vmatpush1.xpose.msra.mxu0 0.0
      %1161 = vmatprep.subr.mxu0 0.0
      %1162 = vmatpush1.xpose.msra.mxu0 0.0
      %1163 = vmatprep.subr.mxu0 0.0
      %1164 = vmatpush1.xpose.msra.mxu0 0.0
      %1165 = vmatprep.subr.mxu0 0.0
      %1166 = vmatpush1.xpose.msra.mxu0 0.0
      %1167 = vmatprep.subr.mxu0 0.0
      %1168 = vmatpush1.xpose.msra.mxu0 0.0
      %1169 = vmatprep.subr.mxu0 0.0
      %1170 = vmatpush1.xpose.msra.mxu0 0.0
      %1171 = vmatprep.subr.mxu0 0.0
      %1172 = vmatpush1.xpose.msra.mxu0 0.0
      %1173 = vmatprep.subr.mxu0 0.0
      %1174 = vmatpush1.xpose.msra.mxu0 0.0
      %1175 = vmatprep.mubr.f32.mxu0 0.0
      %1176 = vmatmul.mubr.f32.gmra.mrb[0].mxu0 %v1079
      %v1177 = vpop.f32.mrb[0].mxu0
      %v1178 = vadd.f32 0.0, %v1177
      %v1179 = vpop.f32.mrb[0].mxu0
      %1180 = vmatprep.mubr.f32.mxu0 0.0
      %1181 = vmatmul.mubr.f32.gmra.mrb[0].mxu0 %v1081
      %v1182 = vpop.f32.mrb[0].mxu0
      %v1183 = vadd.f32 0.0, %v1182
      %v1184 = vpop.f32.mrb[0].mxu0
      %1185 = vmatprep.mubr.f32.mxu0 0.0
      %1186 = vmatmul.mubr.f32.gmra.mrb[0].mxu0 %v1083
      %v1187 = vpop.f32.mrb[0].mxu0
      %v1188 = vadd.f32 0.0, %v1187
      %v1189 = vpop.f32.mrb[0].mxu0
      %1190 = vmatprep.mubr.f32.mxu0 0.0
      %1191 = vmatmul.mubr.f32.gmra.mrb[0].mxu0 %v1085
      %v1192 = vpop.f32.mrb[0].mxu0
      %v1193 = vadd.f32 0.0, %v1192
      %v1194 = vpop.f32.mrb[0].mxu0
      %1195 = vmatprep.mubr.f32.mxu0 0.0
      %1196 = vmatmul.mubr.f32.gmra.mrb[0].mxu0 %v1087
      %v1197 = vpop.f32.mrb[0].mxu0
      %v1198 = vadd.f32 0.0, %v1197
      %v1199 = vpop.f32.mrb[0].mxu0
      %1200 = vmatprep.mubr.f32.mxu0 0.0
      %1201 = vmatmul.mubr.f32.gmra.mrb[0].mxu0 %v1089
      %v1202 = vpop.f32.mrb[0].mxu0
      %v1203 = vadd.f32 0.0, %v1202
      %v1204 = vpop.f32.mrb[0].mxu0
      %1205 = vmatprep.mubr.f32.mxu0 0.0
      %1206 = vmatmul.mubr.f32.gmra.mrb[0].mxu0 %v1091
      %v1207 = vpop.f32.mrb[0].mxu0
      %v1208 = vadd.f32 0.0, %v1207
      %v1209 = vpop.f32.mrb[0].mxu0
      %1210 = vmatprep.mubr.f32.mxu0 0.0
      %1211 = vmatmul.mubr.f32.gmra.mrb[0].mxu0 %v1093
      %v1212 = vpop.f32.mrb[0].mxu0
      %v1213 = vadd.f32 0.0, %v1212
      %v1214 = vpop.f32.mrb[0].mxu0
      %1215 = vdwg.mxu0
      %v1216 = vsel %vm506, %v1178, -inf
      %1217 = vmax.xlane.f32.xlu0 %v1216
      %v1218 = vpop.xlane.xlu0 %1217
      %v1219 = vsel %vm506, %v1183, -inf
      %1220 = vmax.xlane.f32.xlu0 %v1219
      %v1221 = vpop.xlane.xlu0 %1220
      %v1222 = vsel %vm506, %v1188, -inf
      %1223 = vmax.xlane.f32.xlu0 %v1222
      %v1224 = vpop.xlane.xlu0 %1223
      %v1225 = vsel %vm506, %v1193, -inf
      %1226 = vmax.xlane.f32.xlu0 %v1225
      %v1227 = vpop.xlane.xlu0 %1226
      %v1228 = vsel %vm506, %v1198, -inf
      %1229 = vmax.xlane.f32.xlu0 %v1228
      %v1230 = vpop.xlane.xlu0 %1229
      %v1231 = vsel %vm506, %v1203, -inf
      %1232 = vmax.xlane.f32.xlu0 %v1231
      %v1233 = vpop.xlane.xlu0 %1232
      %v1234 = vsel %vm506, %v1208, -inf
      %1235 = vmax.xlane.f32.xlu0 %v1234
      %v1236 = vpop.xlane.xlu0 %1235
      %v1237 = vsel %vm506, %v1213, -inf
      %1238 = vmax.xlane.f32.xlu0 %v1237
      %v1239 = vpop.xlane.xlu0 %1238
      %v1240 = vsub.f32 %v1178, %v1218
      %v1241 = vsub.f32 %v1183, %v1221
      %v1242 = vsub.f32 %v1188, %v1224
      %v1243 = vsub.f32 %v1193, %v1227
      %v1244 = vsub.f32 %v1198, %v1230
      %v1245 = vsub.f32 %v1203, %v1233
      %v1246 = vsub.f32 %v1208, %v1236
      %v1247 = vsub.f32 %v1213, %v1239
      %v1248 = vmul.f32 %v1240, 1.442695
      %v1249 = vpow.pop %v1248
      %v1250 = vmul.f32 %v1241, 1.442695
      %v1251 = vpow.pop %v1250
      %v1252 = vmul.f32 %v1242, 1.442695
      %v1253 = vpow.pop %v1252
      %v1254 = vmul.f32 %v1243, 1.442695
      %v1255 = vpow.pop %v1254
      %v1256 = vmul.f32 %v1244, 1.442695
      %v1257 = vpow.pop %v1256
      %v1258 = vmul.f32 %v1245, 1.442695
      %v1259 = vpow.pop %v1258
      %v1260 = vmul.f32 %v1246, 1.442695
      %v1261 = vpow.pop %v1260
      %v1262 = vmul.f32 %v1247, 1.442695
      %v1263 = vpow.pop %v1262
      %v1264 = vsel %vm506, %v1249, 0.0
      %1265 = vadd.xlane.f32.xlu0 %v1264
      %v1266 = vpop.xlane.xlu0 %1265
      %v1267 = vsel %vm506, %v1251, 0.0
      %1268 = vadd.xlane.f32.xlu0 %v1267
      %v1269 = vpop.xlane.xlu0 %1268
      %v1270 = vsel %vm506, %v1253, 0.0
      %1271 = vadd.xlane.f32.xlu0 %v1270
      %v1272 = vpop.xlane.xlu0 %1271
      %v1273 = vsel %vm506, %v1255, 0.0
      %1274 = vadd.xlane.f32.xlu0 %v1273
      %v1275 = vpop.xlane.xlu0 %1274
      %v1276 = vsel %vm506, %v1257, 0.0
      %1277 = vadd.xlane.f32.xlu0 %v1276
      %v1278 = vpop.xlane.xlu0 %1277
      %v1279 = vsel %vm506, %v1259, 0.0
      %1280 = vadd.xlane.f32.xlu0 %v1279
      %v1281 = vpop.xlane.xlu0 %1280
      %v1282 = vsel %vm506, %v1261, 0.0
      %1283 = vadd.xlane.f32.xlu0 %v1282
      %v1284 = vpop.xlane.xlu0 %1283
      %v1285 = vsel %vm506, %v1263, 0.0
      %1286 = vadd.xlane.f32.xlu0 %v1285
      %v1287 = vpop.xlane.xlu0 %1286
      %v1288 = vrcp.pop %v1266
      %v1289 = vrcp.pop %v1269
      %v1290 = vrcp.pop %v1272
      %v1291 = vrcp.pop %v1275
      %v1292 = vrcp.pop %v1278
      %v1293 = vrcp.pop %v1281
      %v1294 = vrcp.pop %v1284
      %v1295 = vrcp.pop %v1287
      %v1296 = vmul.f32 %v1249, %v1288
      %v1297 = vmul.f32 %v1251, %v1289
      %v1298 = vmul.f32 %v1253, %v1290
      %v1299 = vmul.f32 %v1255, %v1291
      %v1300 = vmul.f32 %v1257, %v1292
      %v1301 = vmul.f32 %v1259, %v1293
      %v1302 = vmul.f32 %v1261, %v1294
      %v1303 = vmul.f32 %v1263, %v1295
      %1304 = vrot.lane.b32.xlu0 %v598, 48
      %v1305 = vpop.permute.xlu0 %1304
      %1306 = vrot.lane.b32.xlu0 %v603, 48
      %v1307 = vpop.permute.xlu0 %1306
      %1308 = vrot.lane.b32.xlu0 %v608, 48
      %v1309 = vpop.permute.xlu0 %1308
      %1310 = vrot.lane.b32.xlu0 %v613, 48
      %v1311 = vpop.permute.xlu0 %1310
      %1312 = vrot.lane.b32.xlu0 %v618, 48
      %v1313 = vpop.permute.xlu0 %1312
      %1314 = vrot.lane.b32.xlu0 %v623, 48
      %v1315 = vpop.permute.xlu0 %1314
      %1316 = vrot.lane.b32.xlu0 %v628, 48
      %v1317 = vpop.permute.xlu0 %1316
      %1318 = vrot.lane.b32.xlu0 %v633, 48
      %v1319 = vpop.permute.xlu0 %1318
      %v1329 = vsel %vm506, %v1296, 0
      %v1332 = vsel %vm506, %v1297, 0
      %v1335 = vsel %vm506, %v1298, 0
      %v1338 = vsel %vm506, %v1299, 0
      %v1341 = vsel %vm506, %v1300, 0
      %v1344 = vsel %vm506, %v1301, 0
      %v1347 = vsel %vm506, %v1302, 0
      %v1350 = vsel %vm506, %v1303, 0
      %1352 = vmatprep.subr.mxu0 0.0
      %1353 = vmatpush1.msra.mxu0 %v1305
      %1354 = vmatprep.subr.mxu0 0.0
      %1355 = vmatpush1.msra.mxu0 %v1307
      %1356 = vmatprep.subr.mxu0 0.0
      %1357 = vmatpush1.msra.mxu0 %v1309
      %1358 = vmatprep.subr.mxu0 0.0
      %1359 = vmatpush1.msra.mxu0 %v1311
      %1360 = vmatprep.subr.mxu0 0.0
      %1361 = vmatpush1.msra.mxu0 %v1313
      %1362 = vmatprep.subr.mxu0 0.0
      %1363 = vmatpush1.msra.mxu0 %v1315
      %1364 = vmatprep.subr.mxu0 0.0
      %1365 = vmatpush1.msra.mxu0 %v1317
      %1366 = vmatprep.subr.mxu0 0.0
      %1367 = vmatpush1.msra.mxu0 %v1319
      %1368 = vmatprep.subr.mxu0 0.0
      %1369 = vmatpush1.msra.mxu0 0.0
      %1370 = vmatprep.subr.mxu0 0.0
      %1371 = vmatpush1.msra.mxu0 0.0
      %1372 = vmatprep.subr.mxu0 0.0
      %1373 = vmatpush1.msra.mxu0 0.0
      %1374 = vmatprep.subr.mxu0 0.0
      %1375 = vmatpush1.msra.mxu0 0.0
      %1376 = vmatprep.subr.mxu0 0.0
      %1377 = vmatpush1.msra.mxu0 0.0
      %1378 = vmatprep.subr.mxu0 0.0
      %1379 = vmatpush1.msra.mxu0 0.0
      %1380 = vmatprep.subr.mxu0 0.0
      %1381 = vmatpush1.msra.mxu0 0.0
      %1382 = vmatprep.subr.mxu0 0.0
      %1383 = vmatpush1.msra.mxu0 0.0
      %1384 = vmatprep.subr.mxu0 0.0
      %1385 = vmatpush1.msra.mxu0 0.0
      %1386 = vmatprep.subr.mxu0 0.0
      %1387 = vmatpush1.msra.mxu0 0.0
      %1388 = vmatprep.subr.mxu0 0.0
      %1389 = vmatpush1.msra.mxu0 0.0
      %1390 = vmatprep.subr.mxu0 0.0
      %1391 = vmatpush1.msra.mxu0 0.0
      %1392 = vmatprep.subr.mxu0 0.0
      %1393 = vmatpush1.msra.mxu0 0.0
      %1394 = vmatprep.subr.mxu0 0.0
      %1395 = vmatpush1.msra.mxu0 0.0
      %1396 = vmatprep.subr.mxu0 0.0
      %1397 = vmatpush1.msra.mxu0 0.0
      %1398 = vmatprep.subr.mxu0 0.0
      %1399 = vmatpush1.msra.mxu0 0.0
      %1400 = vmatprep.subr.mxu0 0.0
      %1401 = vmatpush1.msra.mxu0 0.0
      %1402 = vmatprep.subr.mxu0 0.0
      %1403 = vmatpush1.msra.mxu0 0.0
      %1404 = vmatprep.subr.mxu0 0.0
      %1405 = vmatpush1.msra.mxu0 0.0
      %1406 = vmatprep.subr.mxu0 0.0
      %1407 = vmatpush1.msra.mxu0 0.0
      %1408 = vmatprep.subr.mxu0 0.0
      %1409 = vmatpush1.msra.mxu0 0.0
      %1410 = vmatprep.subr.mxu0 0.0
      %1411 = vmatpush1.msra.mxu0 0.0
      %1412 = vmatprep.subr.mxu0 0.0
      %1413 = vmatpush1.msra.mxu0 0.0
      %1414 = vmatprep.subr.mxu0 0.0
      %1415 = vmatpush1.msra.mxu0 0.0
      %1416 = vmatprep.mubr.f32.mxu0 0.0
      %1417 = vmatmul.mubr.f32.gmra.mrb[0].mxu0 %v1329
      %v1418 = vpop.f32.mrb[0].mxu0
      %v1419 = vadd.f32 0.0, %v1418
      %v1420 = vpop.f32.mrb[0].mxu0
      %1421 = vmatprep.mubr.f32.mxu0 0.0
      %1422 = vmatmul.mubr.f32.gmra.mrb[0].mxu0 %v1332
      %v1423 = vpop.f32.mrb[0].mxu0
      %v1424 = vadd.f32 0.0, %v1423
      %v1425 = vpop.f32.mrb[0].mxu0
      %1426 = vmatprep.mubr.f32.mxu0 0.0
      %1427 = vmatmul.mubr.f32.gmra.mrb[0].mxu0 %v1335
      %v1428 = vpop.f32.mrb[0].mxu0
      %v1429 = vadd.f32 0.0, %v1428
      %v1430 = vpop.f32.mrb[0].mxu0
      %1431 = vmatprep.mubr.f32.mxu0 0.0
      %1432 = vmatmul.mubr.f32.gmra.mrb[0].mxu0 %v1338
      %v1433 = vpop.f32.mrb[0].mxu0
      %v1434 = vadd.f32 0.0, %v1433
      %v1435 = vpop.f32.mrb[0].mxu0
      %1436 = vmatprep.mubr.f32.mxu0 0.0
      %1437 = vmatmul.mubr.f32.gmra.mrb[0].mxu0 %v1341
      %v1438 = vpop.f32.mrb[0].mxu0
      %v1439 = vadd.f32 0.0, %v1438
      %v1440 = vpop.f32.mrb[0].mxu0
      %1441 = vmatprep.mubr.f32.mxu0 0.0
      %1442 = vmatmul.mubr.f32.gmra.mrb[0].mxu0 %v1344
      %v1443 = vpop.f32.mrb[0].mxu0
      %v1444 = vadd.f32 0.0, %v1443
      %v1445 = vpop.f32.mrb[0].mxu0
      %1446 = vmatprep.mubr.f32.mxu0 0.0
      %1447 = vmatmul.mubr.f32.gmra.mrb[0].mxu0 %v1347
      %v1448 = vpop.f32.mrb[0].mxu0
      %v1449 = vadd.f32 0.0, %v1448
      %v1450 = vpop.f32.mrb[0].mxu0
      %1451 = vmatprep.mubr.f32.mxu0 0.0
      %1452 = vmatmul.mubr.f32.gmra.mrb[0].mxu0 %v1350
      %v1453 = vpop.f32.mrb[0].mxu0
      %v1454 = vadd.f32 0.0, %v1453
      %v1455 = vpop.f32.mrb[0].mxu0
      %1456 = vdwg.mxu0
      %1465 = vrot.lane.b32.xlu0 %v1419, 16
      %v1466 = vpop.permute.xlu0 %1465
      %1467 = vrot.lane.b32.xlu0 %v1424, 16
      %v1468 = vpop.permute.xlu0 %1467
      %1469 = vrot.lane.b32.xlu0 %v1429, 16
      %v1470 = vpop.permute.xlu0 %1469
      %1471 = vrot.lane.b32.xlu0 %v1434, 16
      %v1472 = vpop.permute.xlu0 %1471
      %1473 = vrot.lane.b32.xlu0 %v1439, 16
      %v1474 = vpop.permute.xlu0 %1473
      %1475 = vrot.lane.b32.xlu0 %v1444, 16
      %v1476 = vpop.permute.xlu0 %1475
      %1477 = vrot.lane.b32.xlu0 %v1449, 16
      %v1478 = vpop.permute.xlu0 %1477
      %1479 = vrot.lane.b32.xlu0 %v1454, 16
      %v1480 = vpop.permute.xlu0 %1479
      %vm1489 = vcmask 261248
      %1490 = vst.msk [vmem:[#allocation2] sm:$0xff] %vm1489, %v1466
      %1491 = vst.msk [vmem:[#allocation2 + $0x8] sm:$0xff] %vm1489, %v1468
      %1492 = vst.msk [vmem:[#allocation2 + $0x10] sm:$0xff] %vm1489, %v1470
      %1493 = vst.msk [vmem:[#allocation2 + $0x18] sm:$0xff] %vm1489, %v1472
      %1494 = vst.msk [vmem:[#allocation2 + $0x20] sm:$0xff] %vm1489, %v1474
      %1495 = vst.msk [vmem:[#allocation2 + $0x28] sm:$0xff] %vm1489, %v1476
      %1496 = vst.msk [vmem:[#allocation2 + $0x30] sm:$0xff] %vm1489, %v1478
      %1497 = vst.msk [vmem:[#allocation2 + $0x38] sm:$0xff] %vm1489, %v1480
      %1498 = vrot.lane.b32.xlu0 %v636, 96
      %v1499 = vpop.permute.xlu0 %1498
      %1500 = vrot.lane.b32.xlu0 %v637, 96
      %v1501 = vpop.permute.xlu0 %1500
      %1502 = vrot.lane.b32.xlu0 %v638, 96
      %v1503 = vpop.permute.xlu0 %1502
      %1504 = vrot.lane.b32.xlu0 %v639, 96
      %v1505 = vpop.permute.xlu0 %1504
      %1506 = vrot.lane.b32.xlu0 %v640, 96
      %v1507 = vpop.permute.xlu0 %1506
      %1508 = vrot.lane.b32.xlu0 %v641, 96
      %v1509 = vpop.permute.xlu0 %1508
      %1510 = vrot.lane.b32.xlu0 %v642, 96
      %v1511 = vpop.permute.xlu0 %1510
      %1512 = vrot.lane.b32.xlu0 %v643, 96
      %v1513 = vpop.permute.xlu0 %1512
      %1514 = vrot.lane.b32.xlu0 %v598, 96
      %v1515 = vpop.permute.xlu0 %1514
      %1516 = vrot.lane.b32.xlu0 %v603, 96
      %v1517 = vpop.permute.xlu0 %1516
      %1518 = vrot.lane.b32.xlu0 %v608, 96
      %v1519 = vpop.permute.xlu0 %1518
      %1520 = vrot.lane.b32.xlu0 %v613, 96
      %v1521 = vpop.permute.xlu0 %1520
      %1522 = vrot.lane.b32.xlu0 %v618, 96
      %v1523 = vpop.permute.xlu0 %1522
      %1524 = vrot.lane.b32.xlu0 %v623, 96
      %v1525 = vpop.permute.xlu0 %1524
      %1526 = vrot.lane.b32.xlu0 %v628, 96
      %v1527 = vpop.permute.xlu0 %1526
      %1528 = vrot.lane.b32.xlu0 %v633, 96
      %v1529 = vpop.permute.xlu0 %1528
      %v1530 = vsel %vm644, %v1499, 0
      %v1532 = vsel %vm644, %v1501, 0
      %v1534 = vsel %vm644, %v1503, 0
      %v1536 = vsel %vm644, %v1505, 0
      %v1538 = vsel %vm644, %v1507, 0
      %v1540 = vsel %vm644, %v1509, 0
      %v1542 = vsel %vm644, %v1511, 0
      %v1544 = vsel %vm644, %v1513, 0
      %v1546 = vsel %vm644, %v1515, 0
      %v1548 = vsel %vm644, %v1517, 0
      %v1550 = vsel %vm644, %v1519, 0
      %v1552 = vsel %vm644, %v1521, 0
      %v1554 = vsel %vm644, %v1523, 0
      %v1556 = vsel %vm644, %v1525, 0
      %v1558 = vsel %vm644, %v1527, 0
      %v1560 = vsel %vm644, %v1529, 0
      %1562 = vmatprep.subr.mxu0 0.0
      %1563 = vmatpush1.xpose.msra.mxu0 %v1546
      %1564 = vmatprep.subr.mxu0 0.0
      %1565 = vmatpush1.xpose.msra.mxu0 %v1548
      %1566 = vmatprep.subr.mxu0 0.0
      %1567 = vmatpush1.xpose.msra.mxu0 %v1550
      %1568 = vmatprep.subr.mxu0 0.0
      %1569 = vmatpush1.xpose.msra.mxu0 %v1552
      %1570 = vmatprep.subr.mxu0 0.0
      %1571 = vmatpush1.xpose.msra.mxu0 %v1554
      %1572 = vmatprep.subr.mxu0 0.0
      %1573 = vmatpush1.xpose.msra.mxu0 %v1556
      %1574 = vmatprep.subr.mxu0 0.0
      %1575 = vmatpush1.xpose.msra.mxu0 %v1558
      %1576 = vmatprep.subr.mxu0 0.0
      %1577 = vmatpush1.xpose.msra.mxu0 %v1560
      %1578 = vmatprep.subr.mxu0 0.0
      %1579 = vmatpush1.xpose.msra.mxu0 0.0
      %1580 = vmatprep.subr.mxu0 0.0
      %1581 = vmatpush1.xpose.msra.mxu0 0.0
      %1582 = vmatprep.subr.mxu0 0.0
      %1583 = vmatpush1.xpose.msra.mxu0 0.0
      %1584 = vmatprep.subr.mxu0 0.0
      %1585 = vmatpush1.xpose.msra.mxu0 0.0
      %1586 = vmatprep.subr.mxu0 0.0
      %1587 = vmatpush1.xpose.msra.mxu0 0.0
      %1588 = vmatprep.subr.mxu0 0.0
      %1589 = vmatpush1.xpose.msra.mxu0 0.0
      %1590 = vmatprep.subr.mxu0 0.0
      %1591 = vmatpush1.xpose.msra.mxu0 0.0
      %1592 = vmatprep.subr.mxu0 0.0
      %1593 = vmatpush1.xpose.msra.mxu0 0.0
      %1594 = vmatprep.subr.mxu0 0.0
      %1595 = vmatpush1.xpose.msra.mxu0 0.0
      %1596 = vmatprep.subr.mxu0 0.0
      %1597 = vmatpush1.xpose.msra.mxu0 0.0
      %1598 = vmatprep.subr.mxu0 0.0
      %1599 = vmatpush1.xpose.msra.mxu0 0.0
      %1600 = vmatprep.subr.mxu0 0.0
      %1601 = vmatpush1.xpose.msra.mxu0 0.0
      %1602 = vmatprep.subr.mxu0 0.0
      %1603 = vmatpush1.xpose.msra.mxu0 0.0
      %1604 = vmatprep.subr.mxu0 0.0
      %1605 = vmatpush1.xpose.msra.mxu0 0.0
      %1606 = vmatprep.subr.mxu0 0.0
      %1607 = vmatpush1.xpose.msra.mxu0 0.0
      %1608 = vmatprep.subr.mxu0 0.0
      %1609 = vmatpush1.xpose.msra.mxu0 0.0
      %1610 = vmatprep.subr.mxu0 0.0
      %1611 = vmatpush1.xpose.msra.mxu0 0.0
      %1612 = vmatprep.subr.mxu0 0.0
      %1613 = vmatpush1.xpose.msra.mxu0 0.0
      %1614 = vmatprep.subr.mxu0 0.0
      %1615 = vmatpush1.xpose.msra.mxu0 0.0
      %1616 = vmatprep.subr.mxu0 0.0
      %1617 = vmatpush1.xpose.msra.mxu0 0.0
      %1618 = vmatprep.subr.mxu0 0.0
      %1619 = vmatpush1.xpose.msra.mxu0 0.0
      %1620 = vmatprep.subr.mxu0 0.0
      %1621 = vmatpush1.xpose.msra.mxu0 0.0
      %1622 = vmatprep.subr.mxu0 0.0
      %1623 = vmatpush1.xpose.msra.mxu0 0.0
      %1624 = vmatprep.subr.mxu0 0.0
      %1625 = vmatpush1.xpose.msra.mxu0 0.0
      %1626 = vmatprep.mubr.f32.mxu0 0.0
      %1627 = vmatmul.mubr.f32.gmra.mrb[0].mxu0 %v1530
      %v1628 = vpop.f32.mrb[0].mxu0
      %v1629 = vadd.f32 0.0, %v1628
      %v1630 = vpop.f32.mrb[0].mxu0
      %1631 = vmatprep.mubr.f32.mxu0 0.0
      %1632 = vmatmul.mubr.f32.gmra.mrb[0].mxu0 %v1532
      %v1633 = vpop.f32.mrb[0].mxu0
      %v1634 = vadd.f32 0.0, %v1633
      %v1635 = vpop.f32.mrb[0].mxu0
      %1636 = vmatprep.mubr.f32.mxu0 0.0
      %1637 = vmatmul.mubr.f32.gmra.mrb[0].mxu0 %v1534
      %v1638 = vpop.f32.mrb[0].mxu0
      %v1639 = vadd.f32 0.0, %v1638
      %v1640 = vpop.f32.mrb[0].mxu0
      %1641 = vmatprep.mubr.f32.mxu0 0.0
      %1642 = vmatmul.mubr.f32.gmra.mrb[0].mxu0 %v1536
      %v1643 = vpop.f32.mrb[0].mxu0
      %v1644 = vadd.f32 0.0, %v1643
      %v1645 = vpop.f32.mrb[0].mxu0
      %1646 = vmatprep.mubr.f32.mxu0 0.0
      %1647 = vmatmul.mubr.f32.gmra.mrb[0].mxu0 %v1538
      %v1648 = vpop.f32.mrb[0].mxu0
      %v1649 = vadd.f32 0.0, %v1648
      %v1650 = vpop.f32.mrb[0].mxu0
      %1651 = vmatprep.mubr.f32.mxu0 0.0
      %1652 = vmatmul.mubr.f32.gmra.mrb[0].mxu0 %v1540
      %v1653 = vpop.f32.mrb[0].mxu0
      %v1654 = vadd.f32 0.0, %v1653
      %v1655 = vpop.f32.mrb[0].mxu0
      %1656 = vmatprep.mubr.f32.mxu0 0.0
      %1657 = vmatmul.mubr.f32.gmra.mrb[0].mxu0 %v1542
      %v1658 = vpop.f32.mrb[0].mxu0
      %v1659 = vadd.f32 0.0, %v1658
      %v1660 = vpop.f32.mrb[0].mxu0
      %1661 = vmatprep.mubr.f32.mxu0 0.0
      %1662 = vmatmul.mubr.f32.gmra.mrb[0].mxu0 %v1544
      %v1663 = vpop.f32.mrb[0].mxu0
      %v1664 = vadd.f32 0.0, %v1663
      %v1665 = vpop.f32.mrb[0].mxu0
      %1666 = vdwg.mxu0
      %v1667 = vsel %vm506, %v1629, -inf
      %1668 = vmax.xlane.f32.xlu0 %v1667
      %v1669 = vpop.xlane.xlu0 %1668
      %v1670 = vsel %vm506, %v1634, -inf
      %1671 = vmax.xlane.f32.xlu0 %v1670
      %v1672 = vpop.xlane.xlu0 %1671
      %v1673 = vsel %vm506, %v1639, -inf
      %1674 = vmax.xlane.f32.xlu0 %v1673
      %v1675 = vpop.xlane.xlu0 %1674
      %v1676 = vsel %vm506, %v1644, -inf
      %1677 = vmax.xlane.f32.xlu0 %v1676
      %v1678 = vpop.xlane.xlu0 %1677
      %v1679 = vsel %vm506, %v1649, -inf
      %1680 = vmax.xlane.f32.xlu0 %v1679
      %v1681 = vpop.xlane.xlu0 %1680
      %v1682 = vsel %vm506, %v1654, -inf
      %1683 = vmax.xlane.f32.xlu0 %v1682
      %v1684 = vpop.xlane.xlu0 %1683
      %v1685 = vsel %vm506, %v1659, -inf
      %1686 = vmax.xlane.f32.xlu0 %v1685
      %v1687 = vpop.xlane.xlu0 %1686
      %v1688 = vsel %vm506, %v1664, -inf
      %1689 = vmax.xlane.f32.xlu0 %v1688
      %v1690 = vpop.xlane.xlu0 %1689
      %v1691 = vsub.f32 %v1629, %v1669
      %v1692 = vsub.f32 %v1634, %v1672
      %v1693 = vsub.f32 %v1639, %v1675
      %v1694 = vsub.f32 %v1644, %v1678
      %v1695 = vsub.f32 %v1649, %v1681
      %v1696 = vsub.f32 %v1654, %v1684
      %v1697 = vsub.f32 %v1659, %v1687
      %v1698 = vsub.f32 %v1664, %v1690
      %v1699 = vmul.f32 %v1691, 1.442695
      %v1700 = vpow.pop %v1699
      %v1701 = vmul.f32 %v1692, 1.442695
      %v1702 = vpow.pop %v1701
      %v1703 = vmul.f32 %v1693, 1.442695
      %v1704 = vpow.pop %v1703
      %v1705 = vmul.f32 %v1694, 1.442695
      %v1706 = vpow.pop %v1705
      %v1707 = vmul.f32 %v1695, 1.442695
      %v1708 = vpow.pop %v1707
      %v1709 = vmul.f32 %v1696, 1.442695
      %v1710 = vpow.pop %v1709
      %v1711 = vmul.f32 %v1697, 1.442695
      %v1712 = vpow.pop %v1711
      %v1713 = vmul.f32 %v1698, 1.442695
      %v1714 = vpow.pop %v1713
      %v1715 = vsel %vm506, %v1700, 0.0
      %1716 = vadd.xlane.f32.xlu0 %v1715
      %v1717 = vpop.xlane.xlu0 %1716
      %v1718 = vsel %vm506, %v1702, 0.0
      %1719 = vadd.xlane.f32.xlu0 %v1718
      %v1720 = vpop.xlane.xlu0 %1719
      %v1721 = vsel %vm506, %v1704, 0.0
      %1722 = vadd.xlane.f32.xlu0 %v1721
      %v1723 = vpop.xlane.xlu0 %1722
      %v1724 = vsel %vm506, %v1706, 0.0
      %1725 = vadd.xlane.f32.xlu0 %v1724
      %v1726 = vpop.xlane.xlu0 %1725
      %v1727 = vsel %vm506, %v1708, 0.0
      %1728 = vadd.xlane.f32.xlu0 %v1727
      %v1729 = vpop.xlane.xlu0 %1728
      %v1730 = vsel %vm506, %v1710, 0.0
      %1731 = vadd.xlane.f32.xlu0 %v1730
      %v1732 = vpop.xlane.xlu0 %1731
      %v1733 = vsel %vm506, %v1712, 0.0
      %1734 = vadd.xlane.f32.xlu0 %v1733
      %v1735 = vpop.xlane.xlu0 %1734
      %v1736 = vsel %vm506, %v1714, 0.0
      %1737 = vadd.xlane.f32.xlu0 %v1736
      %v1738 = vpop.xlane.xlu0 %1737
      %v1739 = vrcp.pop %v1717
      %v1740 = vrcp.pop %v1720
      %v1741 = vrcp.pop %v1723
      %v1742 = vrcp.pop %v1726
      %v1743 = vrcp.pop %v1729
      %v1744 = vrcp.pop %v1732
      %v1745 = vrcp.pop %v1735
      %v1746 = vrcp.pop %v1738
      %v1747 = vmul.f32 %v1700, %v1739
      %v1748 = vmul.f32 %v1702, %v1740
      %v1749 = vmul.f32 %v1704, %v1741
      %v1750 = vmul.f32 %v1706, %v1742
      %v1751 = vmul.f32 %v1708, %v1743
      %v1752 = vmul.f32 %v1710, %v1744
      %v1753 = vmul.f32 %v1712, %v1745
      %v1754 = vmul.f32 %v1714, %v1746
      %1755 = vrot.lane.b32.xlu0 %v598, 32
      %v1756 = vpop.permute.xlu0 %1755
      %1757 = vrot.lane.b32.xlu0 %v603, 32
      %v1758 = vpop.permute.xlu0 %1757
      %1759 = vrot.lane.b32.xlu0 %v608, 32
      %v1760 = vpop.permute.xlu0 %1759
      %1761 = vrot.lane.b32.xlu0 %v613, 32
      %v1762 = vpop.permute.xlu0 %1761
      %1763 = vrot.lane.b32.xlu0 %v618, 32
      %v1764 = vpop.permute.xlu0 %1763
      %1765 = vrot.lane.b32.xlu0 %v623, 32
      %v1766 = vpop.permute.xlu0 %1765
      %1767 = vrot.lane.b32.xlu0 %v628, 32
      %v1768 = vpop.permute.xlu0 %1767
      %1769 = vrot.lane.b32.xlu0 %v633, 32
      %v1770 = vpop.permute.xlu0 %1769
      %v1780 = vsel %vm506, %v1747, 0
      %v1783 = vsel %vm506, %v1748, 0
      %v1786 = vsel %vm506, %v1749, 0
      %v1789 = vsel %vm506, %v1750, 0
      %v1792 = vsel %vm506, %v1751, 0
      %v1795 = vsel %vm506, %v1752, 0
      %v1798 = vsel %vm506, %v1753, 0
      %v1801 = vsel %vm506, %v1754, 0
      %1803 = vmatprep.subr.mxu0 0.0
      %1804 = vmatpush1.msra.mxu0 %v1756
      %1805 = vmatprep.subr.mxu0 0.0
      %1806 = vmatpush1.msra.mxu0 %v1758
      %1807 = vmatprep.subr.mxu0 0.0
      %1808 = vmatpush1.msra.mxu0 %v1760
      %1809 = vmatprep.subr.mxu0 0.0
      %1810 = vmatpush1.msra.mxu0 %v1762
      %1811 = vmatprep.subr.mxu0 0.0
      %1812 = vmatpush1.msra.mxu0 %v1764
      %1813 = vmatprep.subr.mxu0 0.0
      %1814 = vmatpush1.msra.mxu0 %v1766
      %1815 = vmatprep.subr.mxu0 0.0
      %1816 = vmatpush1.msra.mxu0 %v1768
      %1817 = vmatprep.subr.mxu0 0.0
      %1818 = vmatpush1.msra.mxu0 %v1770
      %1819 = vmatprep.subr.mxu0 0.0
      %1820 = vmatpush1.msra.mxu0 0.0
      %1821 = vmatprep.subr.mxu0 0.0
      %1822 = vmatpush1.msra.mxu0 0.0
      %1823 = vmatprep.subr.mxu0 0.0
      %1824 = vmatpush1.msra.mxu0 0.0
      %1825 = vmatprep.subr.mxu0 0.0
      %1826 = vmatpush1.msra.mxu0 0.0
      %1827 = vmatprep.subr.mxu0 0.0
      %1828 = vmatpush1.msra.mxu0 0.0
      %1829 = vmatprep.subr.mxu0 0.0
      %1830 = vmatpush1.msra.mxu0 0.0
      %1831 = vmatprep.subr.mxu0 0.0
      %1832 = vmatpush1.msra.mxu0 0.0
      %1833 = vmatprep.subr.mxu0 0.0
      %1834 = vmatpush1.msra.mxu0 0.0
      %1835 = vmatprep.subr.mxu0 0.0
      %1836 = vmatpush1.msra.mxu0 0.0
      %1837 = vmatprep.subr.mxu0 0.0
      %1838 = vmatpush1.msra.mxu0 0.0
      %1839 = vmatprep.subr.mxu0 0.0
      %1840 = vmatpush1.msra.mxu0 0.0
      %1841 = vmatprep.subr.mxu0 0.0
      %1842 = vmatpush1.msra.mxu0 0.0
      %1843 = vmatprep.subr.mxu0 0.0
      %1844 = vmatpush1.msra.mxu0 0.0
      %1845 = vmatprep.subr.mxu0 0.0
      %1846 = vmatpush1.msra.mxu0 0.0
      %1847 = vmatprep.subr.mxu0 0.0
      %1848 = vmatpush1.msra.mxu0 0.0
      %1849 = vmatprep.subr.mxu0 0.0
      %1850 = vmatpush1.msra.mxu0 0.0
      %1851 = vmatprep.subr.mxu0 0.0
      %1852 = vmatpush1.msra.mxu0 0.0
      %1853 = vmatprep.subr.mxu0 0.0
      %1854 = vmatpush1.msra.mxu0 0.0
      %1855 = vmatprep.subr.mxu0 0.0
      %1856 = vmatpush1.msra.mxu0 0.0
      %1857 = vmatprep.subr.mxu0 0.0
      %1858 = vmatpush1.msra.mxu0 0.0
      %1859 = vmatprep.subr.mxu0 0.0
      %1860 = vmatpush1.msra.mxu0 0.0
      %1861 = vmatprep.subr.mxu0 0.0
      %1862 = vmatpush1.msra.mxu0 0.0
      %1863 = vmatprep.subr.mxu0 0.0
      %1864 = vmatpush1.msra.mxu0 0.0
      %1865 = vmatprep.subr.mxu0 0.0
      %1866 = vmatpush1.msra.mxu0 0.0
      %1867 = vmatprep.mubr.f32.mxu0 0.0
      %1868 = vmatmul.mubr.f32.gmra.mrb[0].mxu0 %v1780
      %v1869 = vpop.f32.mrb[0].mxu0
      %v1870 = vadd.f32 0.0, %v1869
      %v1871 = vpop.f32.mrb[0].mxu0
      %1872 = vmatprep.mubr.f32.mxu0 0.0
      %1873 = vmatmul.mubr.f32.gmra.mrb[0].mxu0 %v1783
      %v1874 = vpop.f32.mrb[0].mxu0
      %v1875 = vadd.f32 0.0, %v1874
      %v1876 = vpop.f32.mrb[0].mxu0
      %1877 = vmatprep.mubr.f32.mxu0 0.0
      %1878 = vmatmul.mubr.f32.gmra.mrb[0].mxu0 %v1786
      %v1879 = vpop.f32.mrb[0].mxu0
      %v1880 = vadd.f32 0.0, %v1879
      %v1881 = vpop.f32.mrb[0].mxu0
      %1882 = vmatprep.mubr.f32.mxu0 0.0
      %1883 = vmatmul.mubr.f32.gmra.mrb[0].mxu0 %v1789
      %v1884 = vpop.f32.mrb[0].mxu0
      %v1885 = vadd.f32 0.0, %v1884
      %v1886 = vpop.f32.mrb[0].mxu0
      %1887 = vmatprep.mubr.f32.mxu0 0.0
      %1888 = vmatmul.mubr.f32.gmra.mrb[0].mxu0 %v1792
      %v1889 = vpop.f32.mrb[0].mxu0
      %v1890 = vadd.f32 0.0, %v1889
      %v1891 = vpop.f32.mrb[0].mxu0
      %1892 = vmatprep.mubr.f32.mxu0 0.0
      %1893 = vmatmul.mubr.f32.gmra.mrb[0].mxu0 %v1795
      %v1894 = vpop.f32.mrb[0].mxu0
      %v1895 = vadd.f32 0.0, %v1894
      %v1896 = vpop.f32.mrb[0].mxu0
      %1897 = vmatprep.mubr.f32.mxu0 0.0
      %1898 = vmatmul.mubr.f32.gmra.mrb[0].mxu0 %v1798
      %v1899 = vpop.f32.mrb[0].mxu0
      %v1900 = vadd.f32 0.0, %v1899
      %v1901 = vpop.f32.mrb[0].mxu0
      %1902 = vmatprep.mubr.f32.mxu0 0.0
      %1903 = vmatmul.mubr.f32.gmra.mrb[0].mxu0 %v1801
      %v1904 = vpop.f32.mrb[0].mxu0
      %v1905 = vadd.f32 0.0, %v1904
      %v1906 = vpop.f32.mrb[0].mxu0
      %1907 = vdwg.mxu0
      %1916 = vrot.lane.b32.xlu0 %v1870, 32
      %v1917 = vpop.permute.xlu0 %1916
      %1918 = vrot.lane.b32.xlu0 %v1875, 32
      %v1919 = vpop.permute.xlu0 %1918
      %1920 = vrot.lane.b32.xlu0 %v1880, 32
      %v1921 = vpop.permute.xlu0 %1920
      %1922 = vrot.lane.b32.xlu0 %v1885, 32
      %v1923 = vpop.permute.xlu0 %1922
      %1924 = vrot.lane.b32.xlu0 %v1890, 32
      %v1925 = vpop.permute.xlu0 %1924
      %1926 = vrot.lane.b32.xlu0 %v1895, 32
      %v1927 = vpop.permute.xlu0 %1926
      %1928 = vrot.lane.b32.xlu0 %v1900, 32
      %v1929 = vpop.permute.xlu0 %1928
      %1930 = vrot.lane.b32.xlu0 %v1905, 32
      %v1931 = vpop.permute.xlu0 %1930
      %vm1940 = vcmask 392448
      %1941 = vst.msk [vmem:[#allocation2] sm:$0xff] %vm1940, %v1917
      %1942 = vst.msk [vmem:[#allocation2 + $0x8] sm:$0xff] %vm1940, %v1919
      %1943 = vst.msk [vmem:[#allocation2 + $0x10] sm:$0xff] %vm1940, %v1921
      %1944 = vst.msk [vmem:[#allocation2 + $0x18] sm:$0xff] %vm1940, %v1923
      %1945 = vst.msk [vmem:[#allocation2 + $0x20] sm:$0xff] %vm1940, %v1925
      %1946 = vst.msk [vmem:[#allocation2 + $0x28] sm:$0xff] %vm1940, %v1927
      %1947 = vst.msk [vmem:[#allocation2 + $0x30] sm:$0xff] %vm1940, %v1929
      %1948 = vst.msk [vmem:[#allocation2 + $0x38] sm:$0xff] %vm1940, %v1931
      %1949 = vrot.lane.b32.xlu0 %v636, 80
      %v1950 = vpop.permute.xlu0 %1949
      %1951 = vrot.lane.b32.xlu0 %v637, 80
      %v1952 = vpop.permute.xlu0 %1951
      %1953 = vrot.lane.b32.xlu0 %v638, 80
      %v1954 = vpop.permute.xlu0 %1953
      %1955 = vrot.lane.b32.xlu0 %v639, 80
      %v1956 = vpop.permute.xlu0 %1955
      %1957 = vrot.lane.b32.xlu0 %v640, 80
      %v1958 = vpop.permute.xlu0 %1957
      %1959 = vrot.lane.b32.xlu0 %v641, 80
      %v1960 = vpop.permute.xlu0 %1959
      %1961 = vrot.lane.b32.xlu0 %v642, 80
      %v1962 = vpop.permute.xlu0 %1961
      %1963 = vrot.lane.b32.xlu0 %v643, 80
      %v1964 = vpop.permute.xlu0 %1963
      %1965 = vrot.lane.b32.xlu0 %v598, 80
      %v1966 = vpop.permute.xlu0 %1965
      %1967 = vrot.lane.b32.xlu0 %v603, 80
      %v1968 = vpop.permute.xlu0 %1967
      %1969 = vrot.lane.b32.xlu0 %v608, 80
      %v1970 = vpop.permute.xlu0 %1969
      %1971 = vrot.lane.b32.xlu0 %v613, 80
      %v1972 = vpop.permute.xlu0 %1971
      %1973 = vrot.lane.b32.xlu0 %v618, 80
      %v1974 = vpop.permute.xlu0 %1973
      %1975 = vrot.lane.b32.xlu0 %v623, 80
      %v1976 = vpop.permute.xlu0 %1975
      %1977 = vrot.lane.b32.xlu0 %v628, 80
      %v1978 = vpop.permute.xlu0 %1977
      %1979 = vrot.lane.b32.xlu0 %v633, 80
      %v1980 = vpop.permute.xlu0 %1979
      %v1981 = vsel %vm644, %v1950, 0
      %v1983 = vsel %vm644, %v1952, 0
      %v1985 = vsel %vm644, %v1954, 0
      %v1987 = vsel %vm644, %v1956, 0
      %v1989 = vsel %vm644, %v1958, 0
      %v1991 = vsel %vm644, %v1960, 0
      %v1993 = vsel %vm644, %v1962, 0
      %v1995 = vsel %vm644, %v1964, 0
      %v1997 = vsel %vm644, %v1966, 0
      %v1999 = vsel %vm644, %v1968, 0
      %v2001 = vsel %vm644, %v1970, 0
      %v2003 = vsel %vm644, %v1972, 0
      %v2005 = vsel %vm644, %v1974, 0
      %v2007 = vsel %vm644, %v1976, 0
      %v2009 = vsel %vm644, %v1978, 0
      %v2011 = vsel %vm644, %v1980, 0
      %2013 = vmatprep.subr.mxu0 0.0
      %2014 = vmatpush1.xpose.msra.mxu0 %v1997
      %2015 = vmatprep.subr.mxu0 0.0
      %2016 = vmatpush1.xpose.msra.mxu0 %v1999
      %2017 = vmatprep.subr.mxu0 0.0
      %2018 = vmatpush1.xpose.msra.mxu0 %v2001
      %2019 = vmatprep.subr.mxu0 0.0
      %2020 = vmatpush1.xpose.msra.mxu0 %v2003
      %2021 = vmatprep.subr.mxu0 0.0
      %2022 = vmatpush1.xpose.msra.mxu0 %v2005
      %2023 = vmatprep.subr.mxu0 0.0
      %2024 = vmatpush1.xpose.msra.mxu0 %v2007
      %2025 = vmatprep.subr.mxu0 0.0
      %2026 = vmatpush1.xpose.msra.mxu0 %v2009
      %2027 = vmatprep.subr.mxu0 0.0
      %2028 = vmatpush1.xpose.msra.mxu0 %v2011
      %2029 = vmatprep.subr.mxu0 0.0
      %2030 = vmatpush1.xpose.msra.mxu0 0.0
      %2031 = vmatprep.subr.mxu0 0.0
      %2032 = vmatpush1.xpose.msra.mxu0 0.0
      %2033 = vmatprep.subr.mxu0 0.0
      %2034 = vmatpush1.xpose.msra.mxu0 0.0
      %2035 = vmatprep.subr.mxu0 0.0
      %2036 = vmatpush1.xpose.msra.mxu0 0.0
      %2037 = vmatprep.subr.mxu0 0.0
      %2038 = vmatpush1.xpose.msra.mxu0 0.0
      %2039 = vmatprep.subr.mxu0 0.0
      %2040 = vmatpush1.xpose.msra.mxu0 0.0
      %2041 = vmatprep.subr.mxu0 0.0
      %2042 = vmatpush1.xpose.msra.mxu0 0.0
      %2043 = vmatprep.subr.mxu0 0.0
      %2044 = vmatpush1.xpose.msra.mxu0 0.0
      %2045 = vmatprep.subr.mxu0 0.0
      %2046 = vmatpush1.xpose.msra.mxu0 0.0
      %2047 = vmatprep.subr.mxu0 0.0
      %2048 = vmatpush1.xpose.msra.mxu0 0.0
      %2049 = vmatprep.subr.mxu0 0.0
      %2050 = vmatpush1.xpose.msra.mxu0 0.0
      %2051 = vmatprep.subr.mxu0 0.0
      %2052 = vmatpush1.xpose.msra.mxu0 0.0
      %2053 = vmatprep.subr.mxu0 0.0
      %2054 = vmatpush1.xpose.msra.mxu0 0.0
      %2055 = vmatprep.subr.mxu0 0.0
      %2056 = vmatpush1.xpose.msra.mxu0 0.0
      %2057 = vmatprep.subr.mxu0 0.0
      %2058 = vmatpush1.xpose.msra.mxu0 0.0
      %2059 = vmatprep.subr.mxu0 0.0
      %2060 = vmatpush1.xpose.msra.mxu0 0.0
      %2061 = vmatprep.subr.mxu0 0.0
      %2062 = vmatpush1.xpose.msra.mxu0 0.0
      %2063 = vmatprep.subr.mxu0 0.0
      %2064 = vmatpush1.xpose.msra.mxu0 0.0
      %2065 = vmatprep.subr.mxu0 0.0
      %2066 = vmatpush1.xpose.msra.mxu0 0.0
      %2067 = vmatprep.subr.mxu0 0.0
      %2068 = vmatpush1.xpose.msra.mxu0 0.0
      %2069 = vmatprep.subr.mxu0 0.0
      %2070 = vmatpush1.xpose.msra.mxu0 0.0
      %2071 = vmatprep.subr.mxu0 0.0
      %2072 = vmatpush1.xpose.msra.mxu0 0.0
      %2073 = vmatprep.subr.mxu0 0.0
      %2074 = vmatpush1.xpose.msra.mxu0 0.0
      %2075 = vmatprep.subr.mxu0 0.0
      %2076 = vmatpush1.xpose.msra.mxu0 0.0
      %2077 = vmatprep.mubr.f32.mxu0 0.0
      %2078 = vmatmul.mubr.f32.gmra.mrb[0].mxu0 %v1981
      %v2079 = vpop.f32.mrb[0].mxu0
      %v2080 = vadd.f32 0.0, %v2079
      %v2081 = vpop.f32.mrb[0].mxu0
      %2082 = vmatprep.mubr.f32.mxu0 0.0
      %2083 = vmatmul.mubr.f32.gmra.mrb[0].mxu0 %v1983
      %v2084 = vpop.f32.mrb[0].mxu0
      %v2085 = vadd.f32 0.0, %v2084
      %v2086 = vpop.f32.mrb[0].mxu0
      %2087 = vmatprep.mubr.f32.mxu0 0.0
      %2088 = vmatmul.mubr.f32.gmra.mrb[0].mxu0 %v1985
      %v2089 = vpop.f32.mrb[0].mxu0
      %v2090 = vadd.f32 0.0, %v2089
      %v2091 = vpop.f32.mrb[0].mxu0
      %2092 = vmatprep.mubr.f32.mxu0 0.0
      %2093 = vmatmul.mubr.f32.gmra.mrb[0].mxu0 %v1987
      %v2094 = vpop.f32.mrb[0].mxu0
      %v2095 = vadd.f32 0.0, %v2094
      %v2096 = vpop.f32.mrb[0].mxu0
      %2097 = vmatprep.mubr.f32.mxu0 0.0
      %2098 = vmatmul.mubr.f32.gmra.mrb[0].mxu0 %v1989
      %v2099 = vpop.f32.mrb[0].mxu0
      %v2100 = vadd.f32 0.0, %v2099
      %v2101 = vpop.f32.mrb[0].mxu0
      %2102 = vmatprep.mubr.f32.mxu0 0.0
      %2103 = vmatmul.mubr.f32.gmra.mrb[0].mxu0 %v1991
      %v2104 = vpop.f32.mrb[0].mxu0
      %v2105 = vadd.f32 0.0, %v2104
      %v2106 = vpop.f32.mrb[0].mxu0
      %2107 = vmatprep.mubr.f32.mxu0 0.0
      %2108 = vmatmul.mubr.f32.gmra.mrb[0].mxu0 %v1993
      %v2109 = vpop.f32.mrb[0].mxu0
      %v2110 = vadd.f32 0.0, %v2109
      %v2111 = vpop.f32.mrb[0].mxu0
      %2112 = vmatprep.mubr.f32.mxu0 0.0
      %2113 = vmatmul.mubr.f32.gmra.mrb[0].mxu0 %v1995
      %v2114 = vpop.f32.mrb[0].mxu0
      %v2115 = vadd.f32 0.0, %v2114
      %v2116 = vpop.f32.mrb[0].mxu0
      %2117 = vdwg.mxu0
      %v2118 = vsel %vm506, %v2080, -inf
      %2119 = vmax.xlane.f32.xlu0 %v2118
      %v2120 = vpop.xlane.xlu0 %2119
      %v2121 = vsel %vm506, %v2085, -inf
      %2122 = vmax.xlane.f32.xlu0 %v2121
      %v2123 = vpop.xlane.xlu0 %2122
      %v2124 = vsel %vm506, %v2090, -inf
      %2125 = vmax.xlane.f32.xlu0 %v2124
      %v2126 = vpop.xlane.xlu0 %2125
      %v2127 = vsel %vm506, %v2095, -inf
      %2128 = vmax.xlane.f32.xlu0 %v2127
      %v2129 = vpop.xlane.xlu0 %2128
      %v2130 = vsel %vm506, %v2100, -inf
      %2131 = vmax.xlane.f32.xlu0 %v2130
      %v2132 = vpop.xlane.xlu0 %2131
      %v2133 = vsel %vm506, %v2105, -inf
      %2134 = vmax.xlane.f32.xlu0 %v2133
      %v2135 = vpop.xlane.xlu0 %2134
      %v2136 = vsel %vm506, %v2110, -inf
      %2137 = vmax.xlane.f32.xlu0 %v2136
      %v2138 = vpop.xlane.xlu0 %2137
      %v2139 = vsel %vm506, %v2115, -inf
      %2140 = vmax.xlane.f32.xlu0 %v2139
      %v2141 = vpop.xlane.xlu0 %2140
      %v2142 = vsub.f32 %v2080, %v2120
      %v2143 = vsub.f32 %v2085, %v2123
      %v2144 = vsub.f32 %v2090, %v2126
      %v2145 = vsub.f32 %v2095, %v2129
      %v2146 = vsub.f32 %v2100, %v2132
      %v2147 = vsub.f32 %v2105, %v2135
      %v2148 = vsub.f32 %v2110, %v2138
      %v2149 = vsub.f32 %v2115, %v2141
      %v2150 = vmul.f32 %v2142, 1.442695
      %v2151 = vpow.pop %v2150
      %v2152 = vmul.f32 %v2143, 1.442695
      %v2153 = vpow.pop %v2152
      %v2154 = vmul.f32 %v2144, 1.442695
      %v2155 = vpow.pop %v2154
      %v2156 = vmul.f32 %v2145, 1.442695
      %v2157 = vpow.pop %v2156
      %v2158 = vmul.f32 %v2146, 1.442695
      %v2159 = vpow.pop %v2158
      %v2160 = vmul.f32 %v2147, 1.442695
      %v2161 = vpow.pop %v2160
      %v2162 = vmul.f32 %v2148, 1.442695
      %v2163 = vpow.pop %v2162
      %v2164 = vmul.f32 %v2149, 1.442695
      %v2165 = vpow.pop %v2164
      %v2166 = vsel %vm506, %v2151, 0.0
      %2167 = vadd.xlane.f32.xlu0 %v2166
      %v2168 = vpop.xlane.xlu0 %2167
      %v2169 = vsel %vm506, %v2153, 0.0
      %2170 = vadd.xlane.f32.xlu0 %v2169
      %v2171 = vpop.xlane.xlu0 %2170
      %v2172 = vsel %vm506, %v2155, 0.0
      %2173 = vadd.xlane.f32.xlu0 %v2172
      %v2174 = vpop.xlane.xlu0 %2173
      %v2175 = vsel %vm506, %v2157, 0.0
      %2176 = vadd.xlane.f32.xlu0 %v2175
      %v2177 = vpop.xlane.xlu0 %2176
      %v2178 = vsel %vm506, %v2159, 0.0
      %2179 = vadd.xlane.f32.xlu0 %v2178
      %v2180 = vpop.xlane.xlu0 %2179
      %v2181 = vsel %vm506, %v2161, 0.0
      %2182 = vadd.xlane.f32.xlu0 %v2181
      %v2183 = vpop.xlane.xlu0 %2182
      %v2184 = vsel %vm506, %v2163, 0.0
      %2185 = vadd.xlane.f32.xlu0 %v2184
      %v2186 = vpop.xlane.xlu0 %2185
      %v2187 = vsel %vm506, %v2165, 0.0
      %2188 = vadd.xlane.f32.xlu0 %v2187
      %v2189 = vpop.xlane.xlu0 %2188
      %v2190 = vrcp.pop %v2168
      %v2191 = vrcp.pop %v2171
      %v2192 = vrcp.pop %v2174
      %v2193 = vrcp.pop %v2177
      %v2194 = vrcp.pop %v2180
      %v2195 = vrcp.pop %v2183
      %v2196 = vrcp.pop %v2186
      %v2197 = vrcp.pop %v2189
      %v2198 = vmul.f32 %v2151, %v2190
      %v2199 = vmul.f32 %v2153, %v2191
      %v2200 = vmul.f32 %v2155, %v2192
      %v2201 = vmul.f32 %v2157, %v2193
      %v2202 = vmul.f32 %v2159, %v2194
      %v2203 = vmul.f32 %v2161, %v2195
      %v2204 = vmul.f32 %v2163, %v2196
      %v2205 = vmul.f32 %v2165, %v2197
      %2206 = vrot.lane.b32.xlu0 %v598, 16
      %v2207 = vpop.permute.xlu0 %2206
      %2208 = vrot.lane.b32.xlu0 %v603, 16
      %v2209 = vpop.permute.xlu0 %2208
      %2210 = vrot.lane.b32.xlu0 %v608, 16
      %v2211 = vpop.permute.xlu0 %2210
      %2212 = vrot.lane.b32.xlu0 %v613, 16
      %v2213 = vpop.permute.xlu0 %2212
      %2214 = vrot.lane.b32.xlu0 %v618, 16
      %v2215 = vpop.permute.xlu0 %2214
      %2216 = vrot.lane.b32.xlu0 %v623, 16
      %v2217 = vpop.permute.xlu0 %2216
      %2218 = vrot.lane.b32.xlu0 %v628, 16
      %v2219 = vpop.permute.xlu0 %2218
      %2220 = vrot.lane.b32.xlu0 %v633, 16
      %v2221 = vpop.permute.xlu0 %2220
      %v2231 = vsel %vm506, %v2198, 0
      %v2234 = vsel %vm506, %v2199, 0
      %v2237 = vsel %vm506, %v2200, 0
      %v2240 = vsel %vm506, %v2201, 0
      %v2243 = vsel %vm506, %v2202, 0
      %v2246 = vsel %vm506, %v2203, 0
      %v2249 = vsel %vm506, %v2204, 0
      %v2252 = vsel %vm506, %v2205, 0
      %2254 = vmatprep.subr.mxu0 0.0
      %2255 = vmatpush1.msra.mxu0 %v2207
      %2256 = vmatprep.subr.mxu0 0.0
      %2257 = vmatpush1.msra.mxu0 %v2209
      %2258 = vmatprep.subr.mxu0 0.0
      %2259 = vmatpush1.msra.mxu0 %v2211
      %2260 = vmatprep.subr.mxu0 0.0
      %2261 = vmatpush1.msra.mxu0 %v2213
      %2262 = vmatprep.subr.mxu0 0.0
      %2263 = vmatpush1.msra.mxu0 %v2215
      %2264 = vmatprep.subr.mxu0 0.0
      %2265 = vmatpush1.msra.mxu0 %v2217
      %2266 = vmatprep.subr.mxu0 0.0
      %2267 = vmatpush1.msra.mxu0 %v2219
      %2268 = vmatprep.subr.mxu0 0.0
      %2269 = vmatpush1.msra.mxu0 %v2221
      %2270 = vmatprep.subr.mxu0 0.0
      %2271 = vmatpush1.msra.mxu0 0.0
      %2272 = vmatprep.subr.mxu0 0.0
      %2273 = vmatpush1.msra.mxu0 0.0
      %2274 = vmatprep.subr.mxu0 0.0
      %2275 = vmatpush1.msra.mxu0 0.0
      %2276 = vmatprep.subr.mxu0 0.0
      %2277 = vmatpush1.msra.mxu0 0.0
      %2278 = vmatprep.subr.mxu0 0.0
      %2279 = vmatpush1.msra.mxu0 0.0
      %2280 = vmatprep.subr.mxu0 0.0
      %2281 = vmatpush1.msra.mxu0 0.0
      %2282 = vmatprep.subr.mxu0 0.0
      %2283 = vmatpush1.msra.mxu0 0.0
      %2284 = vmatprep.subr.mxu0 0.0
      %2285 = vmatpush1.msra.mxu0 0.0
      %2286 = vmatprep.subr.mxu0 0.0
      %2287 = vmatpush1.msra.mxu0 0.0
      %2288 = vmatprep.subr.mxu0 0.0
      %2289 = vmatpush1.msra.mxu0 0.0
      %2290 = vmatprep.subr.mxu0 0.0
      %2291 = vmatpush1.msra.mxu0 0.0
      %2292 = vmatprep.subr.mxu0 0.0
      %2293 = vmatpush1.msra.mxu0 0.0
      %2294 = vmatprep.subr.mxu0 0.0
      %2295 = vmatpush1.msra.mxu0 0.0
      %2296 = vmatprep.subr.mxu0 0.0
      %2297 = vmatpush1.msra.mxu0 0.0
      %2298 = vmatprep.subr.mxu0 0.0
      %2299 = vmatpush1.msra.mxu0 0.0
      %2300 = vmatprep.subr.mxu0 0.0
      %2301 = vmatpush1.msra.mxu0 0.0
      %2302 = vmatprep.subr.mxu0 0.0
      %2303 = vmatpush1.msra.mxu0 0.0
      %2304 = vmatprep.subr.mxu0 0.0
      %2305 = vmatpush1.msra.mxu0 0.0
      %2306 = vmatprep.subr.mxu0 0.0
      %2307 = vmatpush1.msra.mxu0 0.0
      %2308 = vmatprep.subr.mxu0 0.0
      %2309 = vmatpush1.msra.mxu0 0.0
      %2310 = vmatprep.subr.mxu0 0.0
      %2311 = vmatpush1.msra.mxu0 0.0
      %2312 = vmatprep.subr.mxu0 0.0
      %2313 = vmatpush1.msra.mxu0 0.0
      %2314 = vmatprep.subr.mxu0 0.0
      %2315 = vmatpush1.msra.mxu0 0.0
      %2316 = vmatprep.subr.mxu0 0.0
      %2317 = vmatpush1.msra.mxu0 0.0
      %2318 = vmatprep.mubr.f32.mxu0 0.0
      %2319 = vmatmul.mubr.f32.gmra.mrb[0].mxu0 %v2231
      %v2320 = vpop.f32.mrb[0].mxu0
      %v2321 = vadd.f32 0.0, %v2320
      %v2322 = vpop.f32.mrb[0].mxu0
      %2323 = vmatprep.mubr.f32.mxu0 0.0
      %2324 = vmatmul.mubr.f32.gmra.mrb[0].mxu0 %v2234
      %v2325 = vpop.f32.mrb[0].mxu0
      %v2326 = vadd.f32 0.0, %v2325
      %v2327 = vpop.f32.mrb[0].mxu0
      %2328 = vmatprep.mubr.f32.mxu0 0.0
      %2329 = vmatmul.mubr.f32.gmra.mrb[0].mxu0 %v2237
      %v2330 = vpop.f32.mrb[0].mxu0
      %v2331 = vadd.f32 0.0, %v2330
      %v2332 = vpop.f32.mrb[0].mxu0
      %2333 = vmatprep.mubr.f32.mxu0 0.0
      %2334 = vmatmul.mubr.f32.gmra.mrb[0].mxu0 %v2240
      %v2335 = vpop.f32.mrb[0].mxu0
      %v2336 = vadd.f32 0.0, %v2335
      %v2337 = vpop.f32.mrb[0].mxu0
      %2338 = vmatprep.mubr.f32.mxu0 0.0
      %2339 = vmatmul.mubr.f32.gmra.mrb[0].mxu0 %v2243
      %v2340 = vpop.f32.mrb[0].mxu0
      %v2341 = vadd.f32 0.0, %v2340
      %v2342 = vpop.f32.mrb[0].mxu0
      %2343 = vmatprep.mubr.f32.mxu0 0.0
      %2344 = vmatmul.mubr.f32.gmra.mrb[0].mxu0 %v2246
      %v2345 = vpop.f32.mrb[0].mxu0
      %v2346 = vadd.f32 0.0, %v2345
      %v2347 = vpop.f32.mrb[0].mxu0
      %2348 = vmatprep.mubr.f32.mxu0 0.0
      %2349 = vmatmul.mubr.f32.gmra.mrb[0].mxu0 %v2249
      %v2350 = vpop.f32.mrb[0].mxu0
      %v2351 = vadd.f32 0.0, %v2350
      %v2352 = vpop.f32.mrb[0].mxu0
      %2353 = vmatprep.mubr.f32.mxu0 0.0
      %2354 = vmatmul.mubr.f32.gmra.mrb[0].mxu0 %v2252
      %v2355 = vpop.f32.mrb[0].mxu0
      %v2356 = vadd.f32 0.0, %v2355
      %v2357 = vpop.f32.mrb[0].mxu0
      %2358 = vdwg.mxu0
      %2367 = vrot.lane.b32.xlu0 %v2321, 48
      %v2368 = vpop.permute.xlu0 %2367
      %2369 = vrot.lane.b32.xlu0 %v2326, 48
      %v2370 = vpop.permute.xlu0 %2369
      %2371 = vrot.lane.b32.xlu0 %v2331, 48
      %v2372 = vpop.permute.xlu0 %2371
      %2373 = vrot.lane.b32.xlu0 %v2336, 48
      %v2374 = vpop.permute.xlu0 %2373
      %2375 = vrot.lane.b32.xlu0 %v2341, 48
      %v2376 = vpop.permute.xlu0 %2375
      %2377 = vrot.lane.b32.xlu0 %v2346, 48
      %v2378 = vpop.permute.xlu0 %2377
      %2379 = vrot.lane.b32.xlu0 %v2351, 48
      %v2380 = vpop.permute.xlu0 %2379
      %2381 = vrot.lane.b32.xlu0 %v2356, 48
      %v2382 = vpop.permute.xlu0 %2381
      %vm2391 = vcmask 523648
      %2392 = vst.msk [vmem:[#allocation2] sm:$0xff] %vm2391, %v2368
      %2393 = vst.msk [vmem:[#allocation2 + $0x8] sm:$0xff] %vm2391, %v2370
      %2394 = vst.msk [vmem:[#allocation2 + $0x10] sm:$0xff] %vm2391, %v2372
      %2395 = vst.msk [vmem:[#allocation2 + $0x18] sm:$0xff] %vm2391, %v2374
      %2396 = vst.msk [vmem:[#allocation2 + $0x20] sm:$0xff] %vm2391, %v2376
      %2397 = vst.msk [vmem:[#allocation2 + $0x28] sm:$0xff] %vm2391, %v2378
      %2398 = vst.msk [vmem:[#allocation2 + $0x30] sm:$0xff] %vm2391, %v2380
      %2399 = vst.msk [vmem:[#allocation2 + $0x38] sm:$0xff] %vm2391, %v2382
      %v2400 = vld [vmem:[#allocation2] sm:$0xff]
      %v2401 = vld [vmem:[#allocation2 + $0x8] sm:$0xff]
      %v2402 = vld [vmem:[#allocation2 + $0x10] sm:$0xff]
      %v2403 = vld [vmem:[#allocation2 + $0x18] sm:$0xff]
      %v2404 = vld [vmem:[#allocation2 + $0x20] sm:$0xff]
      %v2405 = vld [vmem:[#allocation2 + $0x28] sm:$0xff]
      %v2406 = vld [vmem:[#allocation2 + $0x30] sm:$0xff]
      %v2407 = vld [vmem:[#allocation2 + $0x38] sm:$0xff]
      %v2408 = vld [vmem:[%s4] sm:$0xff]
      %v2409 = vld [vmem:[%s4 + $0x8] sm:$0xff]
      %v2410 = vld [vmem:[%s4 + $0x10] sm:$0xff]
      %v2411 = vld [vmem:[%s4 + $0x18] sm:$0xff]
      %v2412 = vld [vmem:[%s4 + $0x20] sm:$0xff]
      %v2413 = vld [vmem:[%s4 + $0x28] sm:$0xff]
      %v2414 = vld [vmem:[%s4 + $0x30] sm:$0xff]
      %v2415 = vld [vmem:[%s4 + $0x38] sm:$0xff]
      %v2416 = vld [vmem:[%s1 + $0x2] sm:$0x1]
      %v2417 = vlaneseq
      %v2418 = vshrl.u32 %v2417, 7
      %v2419 = vsub.s32 0, %v2418
      %v2420 = vrot.slane %v2416, %v2419
      %v2422 = vsel %vm506, %v2400, 0
      %v2425 = vsel %vm506, %v2401, 0
      %v2428 = vsel %vm506, %v2402, 0
      %v2431 = vsel %vm506, %v2403, 0
      %v2434 = vsel %vm506, %v2404, 0
      %v2437 = vsel %vm506, %v2405, 0
      %v2440 = vsel %vm506, %v2406, 0
      %v2443 = vsel %vm506, %v2407, 0
      %2445 = vmatprep.subr.mxu0 0.0
      %2446 = vmatpush1.msra.mxu0 %v2408
      %2447 = vmatprep.subr.mxu0 0.0
      %2448 = vmatpush1.msra.mxu0 %v2409
      %2449 = vmatprep.subr.mxu0 0.0
      %2450 = vmatpush1.msra.mxu0 %v2410
      %2451 = vmatprep.subr.mxu0 0.0
      %2452 = vmatpush1.msra.mxu0 %v2411
      %2453 = vmatprep.subr.mxu0 0.0
      %2454 = vmatpush1.msra.mxu0 %v2412
      %2455 = vmatprep.subr.mxu0 0.0
      %2456 = vmatpush1.msra.mxu0 %v2413
      %2457 = vmatprep.subr.mxu0 0.0
      %2458 = vmatpush1.msra.mxu0 %v2414
      %2459 = vmatprep.subr.mxu0 0.0
      %2460 = vmatpush1.msra.mxu0 %v2415
      %2461 = vmatprep.subr.mxu0 0.0
      %2462 = vmatpush1.msra.mxu0 0.0
      %2463 = vmatprep.subr.mxu0 0.0
      %2464 = vmatpush1.msra.mxu0 0.0
      %2465 = vmatprep.subr.mxu0 0.0
      %2466 = vmatpush1.msra.mxu0 0.0
      %2467 = vmatprep.subr.mxu0 0.0
      %2468 = vmatpush1.msra.mxu0 0.0
      %2469 = vmatprep.subr.mxu0 0.0
      %2470 = vmatpush1.msra.mxu0 0.0
      %2471 = vmatprep.subr.mxu0 0.0
      %2472 = vmatpush1.msra.mxu0 0.0
      %2473 = vmatprep.subr.mxu0 0.0
      %2474 = vmatpush1.msra.mxu0 0.0
      %2475 = vmatprep.subr.mxu0 0.0
      %2476 = vmatpush1.msra.mxu0 0.0
      %2477 = vmatprep.subr.mxu0 0.0
      %2478 = vmatpush1.msra.mxu0 0.0
      %2479 = vmatprep.subr.mxu0 0.0
      %2480 = vmatpush1.msra.mxu0 0.0
      %2481 = vmatprep.subr.mxu0 0.0
      %2482 = vmatpush1.msra.mxu0 0.0
      %2483 = vmatprep.subr.mxu0 0.0
      %2484 = vmatpush1.msra.mxu0 0.0
      %2485 = vmatprep.subr.mxu0 0.0
      %2486 = vmatpush1.msra.mxu0 0.0
      %2487 = vmatprep.subr.mxu0 0.0
      %2488 = vmatpush1.msra.mxu0 0.0
      %2489 = vmatprep.subr.mxu0 0.0
      %2490 = vmatpush1.msra.mxu0 0.0
      %2491 = vmatprep.subr.mxu0 0.0
      %2492 = vmatpush1.msra.mxu0 0.0
      %2493 = vmatprep.subr.mxu0 0.0
      %2494 = vmatpush1.msra.mxu0 0.0
      %2495 = vmatprep.subr.mxu0 0.0
      %2496 = vmatpush1.msra.mxu0 0.0
      %2497 = vmatprep.subr.mxu0 0.0
      %2498 = vmatpush1.msra.mxu0 0.0
      %2499 = vmatprep.subr.mxu0 0.0
      %2500 = vmatpush1.msra.mxu0 0.0
      %2501 = vmatprep.subr.mxu0 0.0
      %2502 = vmatpush1.msra.mxu0 0.0
      %2503 = vmatprep.subr.mxu0 0.0
      %2504 = vmatpush1.msra.mxu0 0.0
      %2505 = vmatprep.subr.mxu0 0.0
      %2506 = vmatpush1.msra.mxu0 0.0
      %2507 = vmatprep.subr.mxu0 0.0
      %2508 = vmatpush1.msra.mxu0 0.0
      %2509 = vmatprep.mubr.f32.mxu0 0.0
      %2510 = vmatmul.mubr.f32.gmra.mrb[0].mxu0 %v2422
      %v2511 = vpop.f32.mrb[0].mxu0
      %v2512 = vadd.f32 %v2420, %v2511
      %v2513 = vpop.f32.mrb[0].mxu0
      %2514 = vmatprep.mubr.f32.mxu0 0.0
      %2515 = vmatmul.mubr.f32.gmra.mrb[0].mxu0 %v2425
      %v2516 = vpop.f32.mrb[0].mxu0
      %v2517 = vadd.f32 %v2420, %v2516
      %v2518 = vpop.f32.mrb[0].mxu0
      %2519 = vmatprep.mubr.f32.mxu0 0.0
      %2520 = vmatmul.mubr.f32.gmra.mrb[0].mxu0 %v2428
      %v2521 = vpop.f32.mrb[0].mxu0
      %v2522 = vadd.f32 %v2420, %v2521
      %v2523 = vpop.f32.mrb[0].mxu0
      %2524 = vmatprep.mubr.f32.mxu0 0.0
      %2525 = vmatmul.mubr.f32.gmra.mrb[0].mxu0 %v2431
      %v2526 = vpop.f32.mrb[0].mxu0
      %v2527 = vadd.f32 %v2420, %v2526
      %v2528 = vpop.f32.mrb[0].mxu0
      %2529 = vmatprep.mubr.f32.mxu0 0.0
      %2530 = vmatmul.mubr.f32.gmra.mrb[0].mxu0 %v2434
      %v2531 = vpop.f32.mrb[0].mxu0
      %v2532 = vadd.f32 %v2420, %v2531
      %v2533 = vpop.f32.mrb[0].mxu0
      %2534 = vmatprep.mubr.f32.mxu0 0.0
      %2535 = vmatmul.mubr.f32.gmra.mrb[0].mxu0 %v2437
      %v2536 = vpop.f32.mrb[0].mxu0
      %v2537 = vadd.f32 %v2420, %v2536
      %v2538 = vpop.f32.mrb[0].mxu0
      %2539 = vmatprep.mubr.f32.mxu0 0.0
      %2540 = vmatmul.mubr.f32.gmra.mrb[0].mxu0 %v2440
      %v2541 = vpop.f32.mrb[0].mxu0
      %v2542 = vadd.f32 %v2420, %v2541
      %v2543 = vpop.f32.mrb[0].mxu0
      %2544 = vmatprep.mubr.f32.mxu0 0.0
      %2545 = vmatmul.mubr.f32.gmra.mrb[0].mxu0 %v2443
      %v2546 = vpop.f32.mrb[0].mxu0
      %v2547 = vadd.f32 %v2420, %v2546
      %v2548 = vpop.f32.mrb[0].mxu0
      %2549 = vdwg.mxu0
      %v2550 = vld [vmem:[%s1 + $0x3] sm:$0x1]
      %v2551 = vld [vmem:[%s1 + $0x4] sm:$0x1]
      %v2552 = vsel %vm235, %v2512, 0.0
      %2553 = vadd.xlane.f32.xlu0 %v2552
      %v2554 = vpop.xlane.xlu0 %2553
      %v2555 = vsel %vm235, %v2517, 0.0
      %2556 = vadd.xlane.f32.xlu0 %v2555
      %v2557 = vpop.xlane.xlu0 %2556
      %v2558 = vsel %vm235, %v2522, 0.0
      %2559 = vadd.xlane.f32.xlu0 %v2558
      %v2560 = vpop.xlane.xlu0 %2559
      %v2561 = vsel %vm235, %v2527, 0.0
      %2562 = vadd.xlane.f32.xlu0 %v2561
      %v2563 = vpop.xlane.xlu0 %2562
      %v2564 = vsel %vm235, %v2532, 0.0
      %2565 = vadd.xlane.f32.xlu0 %v2564
      %v2566 = vpop.xlane.xlu0 %2565
      %v2567 = vsel %vm235, %v2537, 0.0
      %2568 = vadd.xlane.f32.xlu0 %v2567
      %v2569 = vpop.xlane.xlu0 %2568
      %v2570 = vsel %vm235, %v2542, 0.0
      %2571 = vadd.xlane.f32.xlu0 %v2570
      %v2572 = vpop.xlane.xlu0 %2571
      %v2573 = vsel %vm235, %v2547, 0.0
      %2574 = vadd.xlane.f32.xlu0 %v2573
      %v2575 = vpop.xlane.xlu0 %2574
      %v2576 = vmul.f32 %v2554, %v260
      %v2577 = vmul.f32 %v2557, %v260
      %v2578 = vmul.f32 %v2560, %v260
      %v2579 = vmul.f32 %v2563, %v260
      %v2580 = vmul.f32 %v2566, %v260
      %v2581 = vmul.f32 %v2569, %v260
      %v2582 = vmul.f32 %v2572, %v260
      %v2583 = vmul.f32 %v2575, %v260
      %v2584 = vsub.f32 %v2512, %v2576
      %v2585 = vsub.f32 %v2517, %v2577
      %v2586 = vsub.f32 %v2522, %v2578
      %v2587 = vsub.f32 %v2527, %v2579
      %v2588 = vsub.f32 %v2532, %v2580
      %v2589 = vsub.f32 %v2537, %v2581
      %v2590 = vsub.f32 %v2542, %v2582
      %v2591 = vsub.f32 %v2547, %v2583
      %v2592 = vmul.f32 %v2584, %v2584
      %v2593 = vmul.f32 %v2585, %v2585
      %v2594 = vmul.f32 %v2586, %v2586
      %v2595 = vmul.f32 %v2587, %v2587
      %v2596 = vmul.f32 %v2588, %v2588
      %v2597 = vmul.f32 %v2589, %v2589
      %v2598 = vmul.f32 %v2590, %v2590
      %v2599 = vmul.f32 %v2591, %v2591
      %v2600 = vsel %vm235, %v2592, 0.0
      %2601 = vadd.xlane.f32.xlu0 %v2600
      %v2602 = vpop.xlane.xlu0 %2601
      %v2603 = vsel %vm235, %v2593, 0.0
      %2604 = vadd.xlane.f32.xlu0 %v2603
      %v2605 = vpop.xlane.xlu0 %2604
      %v2606 = vsel %vm235, %v2594, 0.0
      %2607 = vadd.xlane.f32.xlu0 %v2606
      %v2608 = vpop.xlane.xlu0 %2607
      %v2609 = vsel %vm235, %v2595, 0.0
      %2610 = vadd.xlane.f32.xlu0 %v2609
      %v2611 = vpop.xlane.xlu0 %2610
      %v2612 = vsel %vm235, %v2596, 0.0
      %2613 = vadd.xlane.f32.xlu0 %v2612
      %v2614 = vpop.xlane.xlu0 %2613
      %v2615 = vsel %vm235, %v2597, 0.0
      %2616 = vadd.xlane.f32.xlu0 %v2615
      %v2617 = vpop.xlane.xlu0 %2616
      %v2618 = vsel %vm235, %v2598, 0.0
      %2619 = vadd.xlane.f32.xlu0 %v2618
      %v2620 = vpop.xlane.xlu0 %2619
      %v2621 = vsel %vm235, %v2599, 0.0
      %2622 = vadd.xlane.f32.xlu0 %v2621
      %v2623 = vpop.xlane.xlu0 %2622
      %v2624 = vmul.f32 %v2602, %v260
      %v2625 = vmul.f32 %v2605, %v260
      %v2626 = vmul.f32 %v2608, %v260
      %v2627 = vmul.f32 %v2611, %v260
      %v2628 = vmul.f32 %v2614, %v260
      %v2629 = vmul.f32 %v2617, %v260
      %v2630 = vmul.f32 %v2620, %v260
      %v2631 = vmul.f32 %v2623, %v260
      %v2632 = vadd.f32 %v2624, 1e-05
      %v2633 = vadd.f32 %v2625, 1e-05
      %v2634 = vadd.f32 %v2626, 1e-05
      %v2635 = vadd.f32 %v2627, 1e-05
      %v2636 = vadd.f32 %v2628, 1e-05
      %v2637 = vadd.f32 %v2629, 1e-05
      %v2638 = vadd.f32 %v2630, 1e-05
      %v2639 = vadd.f32 %v2631, 1e-05
      %v2640 = vrsqrt.pop %v2632
      %v2641 = vrsqrt.pop %v2633
      %v2642 = vrsqrt.pop %v2634
      %v2643 = vrsqrt.pop %v2635
      %v2644 = vrsqrt.pop %v2636
      %v2645 = vrsqrt.pop %v2637
      %v2646 = vrsqrt.pop %v2638
      %v2647 = vrsqrt.pop %v2639
      %v2648 = vmul.f32 %v2584, %v2640
      %v2649 = vmul.f32 %v2585, %v2641
      %v2650 = vmul.f32 %v2586, %v2642
      %v2651 = vmul.f32 %v2587, %v2643
      %v2652 = vmul.f32 %v2588, %v2644
      %v2653 = vmul.f32 %v2589, %v2645
      %v2654 = vmul.f32 %v2590, %v2646
      %v2655 = vmul.f32 %v2591, %v2647
      %v2656 = vlaneseq
      %v2657 = vshrl.u32 %v2656, 7
      %v2658 = vsub.s32 0, %v2657
      %v2659 = vrot.slane %v2550, %v2658
      %v2660 = vmul.f32 %v2648, %v2659
      %v2661 = vmul.f32 %v2649, %v2659
      %v2662 = vmul.f32 %v2650, %v2659
      %v2663 = vmul.f32 %v2651, %v2659
      %v2664 = vmul.f32 %v2652, %v2659
      %v2665 = vmul.f32 %v2653, %v2659
      %v2666 = vmul.f32 %v2654, %v2659
      %v2667 = vmul.f32 %v2655, %v2659
      %v2668 = vlaneseq
      %v2669 = vshrl.u32 %v2668, 7
      %v2670 = vsub.s32 0, %v2669
      %v2671 = vrot.slane %v2551, %v2670
      %v2672 = vadd.f32 %v2660, %v2671
      %v2673 = vadd.f32 %v2661, %v2671
      %v2674 = vadd.f32 %v2662, %v2671
      %v2675 = vadd.f32 %v2663, %v2671
      %v2676 = vadd.f32 %v2664, %v2671
      %v2677 = vadd.f32 %v2665, %v2671
      %v2678 = vadd.f32 %v2666, %v2671
      %v2679 = vadd.f32 %v2667, %v2671
      %2680 = vst.msk [vmem:[%s224] sm:$0xff] %vm235, %v2672
      %2681 = vst.msk [vmem:[%s224 + $0x8] sm:$0xff] %vm235, %v2673
      %2682 = vst.msk [vmem:[%s224 + $0x10] sm:$0xff] %vm235, %v2674
      %2683 = vst.msk [vmem:[%s224 + $0x18] sm:$0xff] %vm235, %v2675
      %2684 = vst.msk [vmem:[%s224 + $0x20] sm:$0xff] %vm235, %v2676
      %2685 = vst.msk [vmem:[%s224 + $0x28] sm:$0xff] %vm235, %v2677
      %2686 = vst.msk [vmem:[%s224 + $0x30] sm:$0xff] %vm235, %v2678
      %2687 = vst.msk [vmem:[%s224 + $0x38] sm:$0xff] %vm235, %v2679
      %p2688 = scmp.lt.s32.totalorder %s16, 1
      %s2689 = scalar_select %p2688, %s16, 1
      %s2690 = smul.addr %s2689, 8
      %s2691 = smul.addr %s2690, 8
      %s2692 = scalar_lea.vmem %s5, %s2691
      // Predicated region
      $region41: #{cross_attention_pallas.1} parent=39 // pred_check
        %p2693 = pneg %p144
      $region42: #{cross_attention_pallas.1} parent=39 // pred_check_branch
        %2695 = sbr.rel (%p2693) target = $region44
      $region43: #{cross_attention_pallas.1} parent=39 // pred_region
        _
      $region44: #{cross_attention_pallas.1} parent=39 // pred_fallthru
        _
    $region40: #{cross_attention_pallas.1} parent=5 // pred_fallthru
      _
    %p2696 = scmp.le.s32.totalorder 2, %s11
    // Predicated region
    $region45: #{cross_attention_pallas.1} parent=5 // pred_check
      %p2697 = pneg %p2696
    $region46: #{cross_attention_pallas.1} parent=5 // pred_check_branch
      %2699 = sbr.rel (%p2697) target = $region48
    $region47: #{cross_attention_pallas.1} parent=5 // pred_region
      %s2700 = ssub.s32 %s11, 2
      // Predicated region
      $region49: #{cross_attention_pallas.1} parent=47 // pred_check
        %p2701 = pneg %p150
      $region50: #{cross_attention_pallas.1} parent=47 // pred_check_branch
        %2703 = sbr.rel (%p2701) target = $region52
      $region51: #{cross_attention_pallas.1} parent=47 // pred_region
        %p2704 = scmp.lt.s32.totalorder %s17, 1
        %s2705 = scalar_select %p2704, %s17, 1
        %s2706 = smul.addr %s2705, 8
        %s2707 = smul.addr %s2706, 8
        %s2708 = scalar_lea.vmem %s5, %s2707
      $region52: #{cross_attention_pallas.1} parent=47 // pred_fallthru
        _
    $region48: #{cross_attention_pallas.1} parent=5 // pred_fallthru
      _
  $region6: #{cross_attention_pallas.1} parent=0 // loop_footer
    %s15 = sadd.s32 1, %s11
  $region7: #{cross_attention_pallas.1} parent=0 // loop_footer_branch
    %10 = sbr.rel target = $region3
  $region8: #{cross_attention_pallas.1} parent=0 // loop_exit
    _

</llo_original>
